<compile_context>
chip_gen: v5e
topology: v5e:2x2
jax: 0.10.0
libtpu: 0.0.40
codegen_flags: <defaults>
</compile_context>

<pallas_src>
import jax
import jax.numpy as jnp
from jax import lax
from jax.experimental import pallas as pl
from jax.experimental.pallas import tpu as pltpu


HIDDEN = 500          # nn.Linear(trunc, 500) etc. in the PyTorch module
HIDDEN_PAD = 512      # padded hidden dim (4x128 lanes)
LANE = 128
SUBLANE = 8


def _round_up(x, m):
    return (x + m - 1) // m * m


def _sigmoid(x):
    # 1/(1+exp(-x)) == 0.5*tanh(0.5*x)+0.5 ; one EUP op, no divide, no overflow.
    return 0.5 * jnp.tanh(0.5 * x) + 0.5


def _ode_rhs(y, neg_a, w1, b1, w2, b2, w3, b3, w4, b4):
    """lin(y) + net(y) on padded, VMEM-resident operands.

    y, biases, neg_a are f32; w1..w4 are bf16 (f32 MXU accumulation)."""
    bf16 = jnp.bfloat16
    f32 = jnp.float32

    lin = y * neg_a                                            # VPU, free-ish

    h = _sigmoid(jnp.dot(y.astype(bf16), w1, preferred_element_type=f32) + b1)
    h = _sigmoid(jnp.dot(h.astype(bf16), w2, preferred_element_type=f32) + b2)
    h = _sigmoid(jnp.dot(h.astype(bf16), w3, preferred_element_type=f32) + b3)
    net = jnp.dot(h.astype(bf16), w4, preferred_element_type=f32) + b4

    return lin + net


# ----------------------------------------------------------------------------
# Kernel 1: single forward evaluation (whole network fused, grid=()).
# ----------------------------------------------------------------------------
def _odefunc_kernel(y_ref, neg_a_ref, w1_ref, b1_ref, w2_ref, b2_ref,
                    w3_ref, b3_ref, w4_ref, b4_ref, o_ref):
    o_ref[...] = _ode_rhs(
        y_ref[...], neg_a_ref[...],
        w1_ref[...], b1_ref[...], w2_ref[...], b2_ref[...],
        w3_ref[...], b3_ref[...], w4_ref[...], b4_ref[...])


# ----------------------------------------------------------------------------
# Kernel 2: fused fixed-step forward-Euler integrator.
#   grid=() ; the time loop is an in-kernel fori_loop with y as the carry.
#   Weights/biases are loaded once; bias / neg_a broadcasts are hoisted above
#   the loop; the output is written exactly once after the loop.
# ----------------------------------------------------------------------------
def _make_euler_kernel(num_steps):
    def kernel(dt_ref, y0_ref, neg_a_ref, w1_ref, b1_ref, w2_ref, b2_ref,
               w3_ref, b3_ref, w4_ref, b4_ref, o_ref):
        bp, tp = y0_ref.shape
        hp = b1_ref.shape[1]

        dt = dt_ref[0]                              # SMEM scalar, no recompile
        # Hoist all loads and (1,N)->(bp,N) broadcasts out of the step loop.
        neg_a = jnp.broadcast_to(neg_a_ref[...], (bp, tp))
        b1 = jnp.broadcast_to(b1_ref[...], (bp, hp))
        b2 = jnp.broadcast_to(b2_ref[...], (bp, hp))
        b3 = jnp.broadcast_to(b3_ref[...], (bp, hp))
        b4 = jnp.broadcast_to(b4_ref[...], (bp, tp))
        w1 = w1_ref[...]
        w2 = w2_ref[...]
        w3 = w3_ref[...]
        w4 = w4_ref[...]

        def step(_, y):
            dy = _ode_rhs(y, neg_a, w1, b1, w2, b2, w3, b3, w4, b4)
            return y + dt * dy

        o_ref[...] = lax.fori_loop(0, num_steps, step, y0_ref[...], unroll=2)

    return kernel


# ----------------------------------------------------------------------------
# Parameter preparation (pad + cast once, reuse for all calls).
# ----------------------------------------------------------------------------
def init_params(key, trunc, a):
    """Logical f32 params, (in, out) layout, matching the PyTorch init:
       net weights ~ N(0, 0.1), net biases = 0, lin weight = diag(-a)."""
    k1, k2, k3, k4 = jax.random.split(key, 4)
    std = 0.1
    return {
        "neg_a": jnp.full((1, trunc), -a, dtype=jnp.float32),
        "w1": (std * jax.random.normal(k1, (trunc, HIDDEN))).astype(jnp.float32),
        "b1": jnp.zeros((1, HIDDEN), jnp.float32),
        "w2": (std * jax.random.normal(k2, (HIDDEN, HIDDEN))).astype(jnp.float32),
        "b2": jnp.zeros((1, HIDDEN), jnp.float32),
        "w3": (std * jax.random.normal(k3, (HIDDEN, HIDDEN))).astype(jnp.float32),
        "b3": jnp.zeros((1, HIDDEN), jnp.float32),
        "w4": (std * jax.random.normal(k4, (HIDDEN, trunc))).astype(jnp.float32),
        "b4": jnp.zeros((1, trunc), jnp.float32),
    }


def prepare_params(params, trunc):
    """Zero-pad to TPU-friendly shapes and cast weights to bf16.

    The zero padding is what keeps sigmoid(0)=0.5 in padded hidden units from
    leaking (padded rows of the next weight are 0) and keeps padded trunc
    lanes exactly 0 through the integration."""
    tp = _round_up(trunc, LANE)
    hp = HIDDEN_PAD
    bf16 = jnp.bfloat16

    def pad2(x, shape):
        out = jnp.zeros(shape, x.dtype)
        return out.at[:x.shape[0], :x.shape[1]].set(x)

    return {
        "trunc": trunc,
        "trunc_pad": tp,
        "neg_a": pad2(params["neg_a"], (1, tp)),
        "w1": pad2(params["w1"], (tp, hp)).astype(bf16),
        "b1": pad2(params["b1"], (1, hp)),
        "w2": pad2(params["w2"], (hp, hp)).astype(bf16),
        "b2": pad2(params["b2"], (1, hp)),
        "w3": pad2(params["w3"], (hp, hp)).astype(bf16),
        "b3": pad2(params["b3"], (1, hp)),
        "w4": pad2(params["w4"], (hp, tp)).astype(bf16),
        "b4": pad2(params["b4"], (1, tp)),
    }


def _param_args(prepped):
    return (prepped["neg_a"], prepped["w1"], prepped["b1"],
            prepped["w2"], prepped["b2"], prepped["w3"], prepped["b3"],
            prepped["w4"], prepped["b4"])


def _pad_state(y, trunc, trunc_pad):
    b = y.shape[0]
    bp = _round_up(b, SUBLANE)
    y_p = jnp.zeros((bp, trunc_pad), jnp.float32).at[:b, :trunc].set(y)
    return y_p, b, bp


def _full_spec(a):
    zeros = (0,) * a.ndim
    return pl.BlockSpec(a.shape, lambda _z=zeros: _z)


# ----------------------------------------------------------------------------
# Wrappers
# ----------------------------------------------------------------------------
def odefunc_forward(y, prepped):
    """Single forward(t, y) evaluation.  y: (B, trunc) f32."""
    trunc, tp = prepped["trunc"], prepped["trunc_pad"]
    y_p, b, bp = _pad_state(y, trunc, tp)
    args = (y_p,) + _param_args(prepped)

    out_p = pl.pallas_call(
        _odefunc_kernel,
        out_shape=jax.ShapeDtypeStruct((bp, tp), jnp.float32),
        grid=(),
        in_specs=[_full_spec(a) for a in args],
        out_specs=pl.BlockSpec((bp, tp), lambda: (0, 0)),
    )(*args)
    return out_p[:b, :trunc]


def odefunc_integrate(y0, prepped, *, dt, num_steps):
    """Fused forward-Euler: y_{k+1} = y_k + dt * f(y_k).
    One pallas_call, one weight DMA; all steps run in an in-kernel loop."""
    trunc, tp = prepped["trunc"], prepped["trunc_pad"]
    y_p, b, bp = _pad_state(y0, trunc, tp)
    dt_arr = jnp.asarray([dt], dtype=jnp.float32)
    args = (y_p,) + _param_args(prepped)

    in_specs = ([pl.BlockSpec(memory_space=pltpu.MemorySpace.SMEM)]  # dt scalar
                + [_full_spec(a) for a in args])

    out_p = pl.pallas_call(
        _make_euler_kernel(int(num_steps)),
        out_shape=jax.ShapeDtypeStruct((bp, tp), jnp.float32),
        grid=(),
        in_specs=in_specs,
        out_specs=pl.BlockSpec((bp, tp), lambda: (0, 0)),
    )(dt_arr, *args)
    return out_p[:b, :trunc]


# ----------------------------------------------------------------------------
# Pure-JAX references (mimic the kernel's bf16-weight arithmetic).
# ----------------------------------------------------------------------------
def odefunc_reference(y, params):
    bf16 = jnp.bfloat16
    f32 = jnp.float32
    lin = y * params["neg_a"]
    h = _sigmoid(jnp.dot(y.astype(bf16), params["w1"].astype(bf16),
                         preferred_element_type=f32) + params["b1"])
    h = _sigmoid(jnp.dot(h.astype(bf16), params["w2"].astype(bf16),
                         preferred_element_type=f32) + params["b2"])
    h = _sigmoid(jnp.dot(h.astype(bf16), params["w3"].astype(bf16),
                         preferred_element_type=f32) + params["b3"])
    net = jnp.dot(h.astype(bf16), params["w4"].astype(bf16),
                  preferred_element_type=f32) + params["b4"]
    return lin + net


def euler_reference(y0, params, *, dt, num_steps):
    y = y0
    for _ in range(num_steps):
        y = y + dt * odefunc_reference(y, params)
    return y


# ----------------------------------------------------------------------------
if __name__ == "__main__":
    trunc = 16
    batch = 8
    a = 0.5
    dt = 0.01
    num_steps = 20

    key = jax.random.PRNGKey(0)
    k_params, k_y = jax.random.split(key)
    params = init_params(k_params, trunc, a)
    prepped = prepare_params(params, trunc)
    y = jax.random.normal(k_y, (batch, trunc), dtype=jnp.float32)

    # Single forward evaluation (the module's forward).
    out = jax.block_until_ready(odefunc_forward(y, prepped))
    ref = odefunc_reference(y, params)
    assert out.shape == (batch, trunc)
    assert jnp.allclose(out, ref, atol=1e-2, rtol=1e-2), "forward mismatch"

    # Fused multi-step Euler integration (weights resident, in-kernel loop).
    y_T = jax.block_until_ready(
        odefunc_integrate(y, prepped, dt=dt, num_steps=num_steps))
    y_T_ref = euler_reference(y, params, dt=dt, num_steps=num_steps)
    assert y_T.shape == (batch, trunc)
    assert jnp.allclose(y_T, y_T_ref, atol=1e-2, rtol=1e-2), "integrate mismatch"

    print("KERNEL_OK")
</pallas_src>

<mosaic_0001>
module attributes {stable_mosaic.version = 11 : i64} {
  func.func @_odefunc_kernel(%arg0: memref<8x128xf32, #tpu.memory_space<vmem>>, %arg1: memref<1x128xf32, #tpu.memory_space<vmem>>, %arg2: memref<128x512xbf16, #tpu.memory_space<vmem>>, %arg3: memref<1x512xf32, #tpu.memory_space<vmem>>, %arg4: memref<512x512xbf16, #tpu.memory_space<vmem>>, %arg5: memref<1x512xf32, #tpu.memory_space<vmem>>, %arg6: memref<512x512xbf16, #tpu.memory_space<vmem>>, %arg7: memref<1x512xf32, #tpu.memory_space<vmem>>, %arg8: memref<512x128xbf16, #tpu.memory_space<vmem>>, %arg9: memref<1x128xf32, #tpu.memory_space<vmem>>, %arg10: memref<8x128xf32, #tpu.memory_space<vmem>>) attributes {dimension_semantics = [], scalar_prefetch = 0 : i64, scratch_operands = 0 : i64, tpu.core_type = #tpu.core_type<tc>} {
    %c0 = arith.constant 0 : index
    %c0_0 = arith.constant 0 : index
    %0 = vector.load %arg0[%c0, %c0_0] : memref<8x128xf32, #tpu.memory_space<vmem>>, vector<8x128xf32>
    %c0_1 = arith.constant 0 : index
    %c0_2 = arith.constant 0 : index
    %1 = vector.load %arg1[%c0_1, %c0_2] : memref<1x128xf32, #tpu.memory_space<vmem>>, vector<1x128xf32>
    %c0_3 = arith.constant 0 : index
    %c0_4 = arith.constant 0 : index
    %2 = vector.load %arg2[%c0_3, %c0_4] : memref<128x512xbf16, #tpu.memory_space<vmem>>, vector<128x512xbf16>
    %c0_5 = arith.constant 0 : index
    %c0_6 = arith.constant 0 : index
    %3 = vector.load %arg3[%c0_5, %c0_6] : memref<1x512xf32, #tpu.memory_space<vmem>>, vector<1x512xf32>
    %c0_7 = arith.constant 0 : index
    %c0_8 = arith.constant 0 : index
    %4 = vector.load %arg4[%c0_7, %c0_8] : memref<512x512xbf16, #tpu.memory_space<vmem>>, vector<512x512xbf16>
    %c0_9 = arith.constant 0 : index
    %c0_10 = arith.constant 0 : index
    %5 = vector.load %arg5[%c0_9, %c0_10] : memref<1x512xf32, #tpu.memory_space<vmem>>, vector<1x512xf32>
    %c0_11 = arith.constant 0 : index
    %c0_12 = arith.constant 0 : index
    %6 = vector.load %arg6[%c0_11, %c0_12] : memref<512x512xbf16, #tpu.memory_space<vmem>>, vector<512x512xbf16>
    %c0_13 = arith.constant 0 : index
    %c0_14 = arith.constant 0 : index
    %7 = vector.load %arg7[%c0_13, %c0_14] : memref<1x512xf32, #tpu.memory_space<vmem>>, vector<1x512xf32>
    %c0_15 = arith.constant 0 : index
    %c0_16 = arith.constant 0 : index
    %8 = vector.load %arg8[%c0_15, %c0_16] : memref<512x128xbf16, #tpu.memory_space<vmem>>, vector<512x128xbf16>
    %c0_17 = arith.constant 0 : index
    %c0_18 = arith.constant 0 : index
    %9 = vector.load %arg9[%c0_17, %c0_18] : memref<1x128xf32, #tpu.memory_space<vmem>>, vector<1x128xf32>
    %10 = vector.broadcast %1 : vector<1x128xf32> to vector<8x128xf32>
    %11 = arith.mulf %0, %10 : vector<8x128xf32>
    %12 = arith.truncf %0 : vector<8x128xf32> to vector<8x128xbf16>
    %cst = arith.constant dense<0.000000e+00> : vector<8x512xf32>
    %13 = tpu.matmul %12, %2, %cst {dimension_numbers = #tpu.dot_dimension_numbers<[1], [0], [0], [1], [0, 0, 1, 1], [], []>} : vector<8x128xbf16>, vector<128x512xbf16>, vector<8x512xf32> -> vector<8x512xf32>
    %14 = vector.broadcast %3 : vector<1x512xf32> to vector<8x512xf32>
    %15 = arith.addf %13, %14 : vector<8x512xf32>
    %cst_19 = arith.constant 5.000000e-01 : f32
    %16 = vector.broadcast %cst_19 : f32 to vector<8x512xf32>
    %17 = arith.mulf %16, %15 : vector<8x512xf32>
    %18 = math.tanh %17 : vector<8x512xf32>
    %cst_20 = arith.constant 5.000000e-01 : f32
    %19 = vector.broadcast %cst_20 : f32 to vector<8x512xf32>
    %20 = arith.mulf %19, %18 : vector<8x512xf32>
    %cst_21 = arith.constant 5.000000e-01 : f32
    %21 = vector.broadcast %cst_21 : f32 to vector<8x512xf32>
    %22 = arith.addf %20, %21 : vector<8x512xf32>
    %23 = arith.truncf %22 : vector<8x512xf32> to vector<8x512xbf16>
    %cst_22 = arith.constant dense<0.000000e+00> : vector<8x512xf32>
    %24 = tpu.matmul %23, %4, %cst_22 {dimension_numbers = #tpu.dot_dimension_numbers<[1], [0], [0], [1], [0, 0, 1, 1], [], []>} : vector<8x512xbf16>, vector<512x512xbf16>, vector<8x512xf32> -> vector<8x512xf32>
    %25 = vector.broadcast %5 : vector<1x512xf32> to vector<8x512xf32>
    %26 = arith.addf %24, %25 : vector<8x512xf32>
    %cst_23 = arith.constant 5.000000e-01 : f32
    %27 = vector.broadcast %cst_23 : f32 to vector<8x512xf32>
    %28 = arith.mulf %27, %26 : vector<8x512xf32>
    %29 = math.tanh %28 : vector<8x512xf32>
    %cst_24 = arith.constant 5.000000e-01 : f32
    %30 = vector.broadcast %cst_24 : f32 to vector<8x512xf32>
    %31 = arith.mulf %30, %29 : vector<8x512xf32>
    %cst_25 = arith.constant 5.000000e-01 : f32
    %32 = vector.broadcast %cst_25 : f32 to vector<8x512xf32>
    %33 = arith.addf %31, %32 : vector<8x512xf32>
    %34 = arith.truncf %33 : vector<8x512xf32> to vector<8x512xbf16>
    %cst_26 = arith.constant dense<0.000000e+00> : vector<8x512xf32>
    %35 = tpu.matmul %34, %6, %cst_26 {dimension_numbers = #tpu.dot_dimension_numbers<[1], [0], [0], [1], [0, 0, 1, 1], [], []>} : vector<8x512xbf16>, vector<512x512xbf16>, vector<8x512xf32> -> vector<8x512xf32>
    %36 = vector.broadcast %7 : vector<1x512xf32> to vector<8x512xf32>
    %37 = arith.addf %35, %36 : vector<8x512xf32>
    %cst_27 = arith.constant 5.000000e-01 : f32
    %38 = vector.broadcast %cst_27 : f32 to vector<8x512xf32>
    %39 = arith.mulf %38, %37 : vector<8x512xf32>
    %40 = math.tanh %39 : vector<8x512xf32>
    %cst_28 = arith.constant 5.000000e-01 : f32
    %41 = vector.broadcast %cst_28 : f32 to vector<8x512xf32>
    %42 = arith.mulf %41, %40 : vector<8x512xf32>
    %cst_29 = arith.constant 5.000000e-01 : f32
    %43 = vector.broadcast %cst_29 : f32 to vector<8x512xf32>
    %44 = arith.addf %42, %43 : vector<8x512xf32>
    %45 = arith.truncf %44 : vector<8x512xf32> to vector<8x512xbf16>
    %cst_30 = arith.constant dense<0.000000e+00> : vector<8x128xf32>
    %46 = tpu.matmul %45, %8, %cst_30 {dimension_numbers = #tpu.dot_dimension_numbers<[1], [0], [0], [1], [0, 0, 1, 1], [], []>} : vector<8x512xbf16>, vector<512x128xbf16>, vector<8x128xf32> -> vector<8x128xf32>
    %47 = vector.broadcast %9 : vector<1x128xf32> to vector<8x128xf32>
    %48 = arith.addf %46, %47 : vector<8x128xf32>
    %49 = arith.addf %11, %48 : vector<8x128xf32>
    %c0_31 = arith.constant 0 : index
    %c0_32 = arith.constant 0 : index
    %50 = vector.load %arg10[%c0_31, %c0_32] : memref<8x128xf32, #tpu.memory_space<vmem>>, vector<8x128xf32>
    tpu.vector_store %arg10[%c0_31, %c0_32], %49 {strides = array<i32>} : memref<8x128xf32, #tpu.memory_space<vmem>>, vector<8x128xf32>,
    return
  }
}

</mosaic_0001>

<llo_original>
// kernel: tpu_custom_call.1
$region0: #{tpu_custom_call.1}
  #allocation0 [shape = 'u32[]', space=smem, size = 0x4, offset = 0x4, fixed_abs, tag = 'smem constant byte address 0x4 - core index']
  #allocation1 [shape = 'u32[72,128]{1,0:T(1,128)}', space=vmem, size = 0x9000, scoped, tag = 'internal scratch']
  %s0 = inlined_call_operand.hbm [shape: f32[8,128], index: 0, kind: input, shape index: {}]
  %s1 = inlined_call_operand.hbm [shape: f32[1,128], index: 1, kind: input, shape index: {}]
  %s2 = inlined_call_operand.hbm [shape: bf16[128,512], index: 2, kind: input, shape index: {}]
  %s3 = inlined_call_operand.hbm [shape: f32[1,512], index: 3, kind: input, shape index: {}]
  %s4 = inlined_call_operand.hbm [shape: bf16[512,512], index: 4, kind: input, shape index: {}]
  %s5 = inlined_call_operand.vmem [shape: f32[1,512], index: 5, kind: input, shape index: {}]
  %s6 = inlined_call_operand.hbm [shape: bf16[512,512], index: 6, kind: input, shape index: {}]
  %s7 = inlined_call_operand.hbm [shape: f32[1,512], index: 7, kind: input, shape index: {}]
  %s8 = inlined_call_operand.hbm [shape: bf16[512,128], index: 8, kind: input, shape index: {}]
  %s9 = inlined_call_operand.vmem [shape: f32[1,128], index: 9, kind: input, shape index: {}]
  %s10 = inlined_call_operand.hbm [shape: f32[8,128], index: 10, kind: output, shape index: {}]
  %s11 = sld [smem:[#allocation0]]
  $region82: #{tpu_custom_call.1} parent=0
    _
  %s13 = ssub.s32 1, %s11
  %s14 = scalar_select 0, %s13, %s11
  $region1: #{tpu_custom_call.1} parent=0
    #allocation2 [shape = 'u8[4096]{0}', space=vmem, size = 0x1000, scoped, tag = 'input window, operand 0, single buffered']
    #allocation3 [shape = 's32[1]{0}', space=sflag, size = 0x4, scoped, tag = 'scoped memory for tpu_custom_call.1']
    #allocation4 [shape = 's32[1]{0}', space=sflag, size = 0x4, scoped, tag = 'scoped memory for tpu_custom_call.1']
    #allocation5 [shape = 'u8[512]{0}', space=vmem, size = 0x400, scoped, tag = 'input window, operand 1, single buffered']
    #allocation6 [shape = 's32[1]{0}', space=sflag, size = 0x4, scoped, tag = 'scoped memory for tpu_custom_call.1']
    #allocation7 [shape = 'u8[131072]{0}', space=vmem, size = 0x20000, scoped, tag = 'input window, operand 2, single buffered']
    #allocation8 [shape = 'u8[2048]{0}', space=vmem, size = 0x800, scoped, tag = 'input window, operand 3, single buffered']
    #allocation9 [shape = 's32[1]{0}', space=sflag, size = 0x4, scoped, tag = 'scoped memory for tpu_custom_call.1']
    #allocation10 [shape = 'u8[524288]{0}', space=vmem, size = 0x80000, scoped, tag = 'input window, operand 4, single buffered']
    #allocation11 [shape = 'u8[524288]{0}', space=vmem, size = 0x80000, scoped, tag = 'input window, operand 6, single buffered']
    #allocation12 [shape = 's32[1]{0}', space=sflag, size = 0x4, scoped, tag = 'scoped memory for tpu_custom_call.1']
    #allocation13 [shape = 'u8[2048]{0}', space=vmem, size = 0x800, scoped, tag = 'input window, operand 7, single buffered']
    #allocation14 [shape = 'u8[131072]{0}', space=vmem, size = 0x20000, scoped, tag = 'input window, operand 8, single buffered']
    #allocation15 [shape = 's32[1]{0}', space=sflag, size = 0x4, scoped, tag = 'scoped memory for tpu_custom_call.1']
    #allocation16 [shape = 'u8[4096]{0}', space=vmem, size = 0x1000, scoped, tag = 'output window, operand 0, single buffered']
    %15 = vsyncpa [#allocation3], 0
    %16 = vsyncpa [#allocation6], 0
    %17 = vsyncpa [#allocation9], 0
    %18 = vsyncpa [#allocation12], 0
    %19 = vsyncpa [#allocation15], 0
    %20 = vsyncpa [#allocation4], 0
    // Predicated region
    $region2: #{tpu_custom_call.1} parent=1 // pred_check
      _
    $region3: #{tpu_custom_call.1} parent=1 // pred_check_branch
      %22 = sbr.rel (0) target = $region5
    $region4: #{tpu_custom_call.1} parent=1 // pred_region
      %24 = vsyncadd [#allocation3], 0
      %s26 = sshll.u32 %s0, 4
      %s27 = int_to_ptr.hbm [resolvable:$true] %s26
      %s28 = sshll.u32 [#allocation2], 4
      %s29 = int_to_ptr.vmem [resolvable:$true] %s28
      %31 = dma.hbm_to_vmem [thread:$0]  %s27, 128, %s29, [#allocation3]
    $region5: #{tpu_custom_call.1} parent=1 // pred_fallthru
      _
    // Predicated region
    $region6: #{tpu_custom_call.1} parent=1 // pred_check
      _
    $region7: #{tpu_custom_call.1} parent=1 // pred_check_branch
      %33 = sbr.rel (0) target = $region9
    $region8: #{tpu_custom_call.1} parent=1 // pred_region
      %35 = vsyncadd [#allocation6], 0
      %s37 = sshll.u32 %s1, 4
      %s38 = int_to_ptr.hbm [resolvable:$true] %s37
      %s39 = sshll.u32 [#allocation5], 4
      %s40 = int_to_ptr.vmem [resolvable:$true] %s39
      %42 = dma.hbm_to_vmem [thread:$0]  %s38, 16, %s40, [#allocation6]
    $region9: #{tpu_custom_call.1} parent=1 // pred_fallthru
      _
    // Predicated region
    $region10: #{tpu_custom_call.1} parent=1 // pred_check
      _
    $region11: #{tpu_custom_call.1} parent=1 // pred_check_branch
      %44 = sbr.rel (0) target = $region13
    $region12: #{tpu_custom_call.1} parent=1 // pred_region
      %46 = vsyncadd [#allocation6], 0
      %s47 = sshll.u32 %s2, 4
      %s48 = int_to_ptr.hbm [resolvable:$true] %s47
      %s49 = sshll.u32 [#allocation7], 4
      %s50 = int_to_ptr.vmem [resolvable:$true] %s49
      %55 = dma.hbm_to_vmem [thread:$0]  %s48, 4096, %s50, [#allocation6], 256, 256, 16
    $region13: #{tpu_custom_call.1} parent=1 // pred_fallthru
      _
    // Predicated region
    $region14: #{tpu_custom_call.1} parent=1 // pred_check
      _
    $region15: #{tpu_custom_call.1} parent=1 // pred_check_branch
      %57 = sbr.rel (0) target = $region17
    $region16: #{tpu_custom_call.1} parent=1 // pred_region
      %59 = vsyncadd [#allocation9], 0
      %s61 = sshll.u32 %s3, 4
      %s62 = int_to_ptr.hbm [resolvable:$true] %s61
      %s63 = sshll.u32 [#allocation8], 4
      %s64 = int_to_ptr.vmem [resolvable:$true] %s63
      %66 = dma.hbm_to_vmem [thread:$0]  %s62, 64, %s64, [#allocation9]
    $region17: #{tpu_custom_call.1} parent=1 // pred_fallthru
      _
    // Predicated region
    $region18: #{tpu_custom_call.1} parent=1 // pred_check
      _
    $region19: #{tpu_custom_call.1} parent=1 // pred_check_branch
      %68 = sbr.rel (0) target = $region21
    $region20: #{tpu_custom_call.1} parent=1 // pred_region
      %70 = vsyncadd [#allocation9], 0
      %s71 = sshll.u32 %s4, 4
      %s72 = int_to_ptr.hbm [resolvable:$true] %s71
      %s73 = sshll.u32 [#allocation10], 4
      %s74 = int_to_ptr.vmem [resolvable:$true] %s73
      %79 = dma.hbm_to_vmem [thread:$0]  %s72, 16384, %s74, [#allocation9], 256, 256, 16
    $region21: #{tpu_custom_call.1} parent=1 // pred_fallthru
      _
    // Predicated region
    $region22: #{tpu_custom_call.1} parent=1 // pred_check
      _
    $region23: #{tpu_custom_call.1} parent=1 // pred_check_branch
      %81 = sbr.rel (0) target = $region25
    $region24: #{tpu_custom_call.1} parent=1 // pred_region
      _
    $region25: #{tpu_custom_call.1} parent=1 // pred_fallthru
      _
    // Predicated region
    $region26: #{tpu_custom_call.1} parent=1 // pred_check
      _
    $region27: #{tpu_custom_call.1} parent=1 // pred_check_branch
      %83 = sbr.rel (0) target = $region29
    $region28: #{tpu_custom_call.1} parent=1 // pred_region
      %85 = vsyncadd [#allocation12], 0
      %s86 = sshll.u32 %s6, 4
      %s87 = int_to_ptr.hbm [resolvable:$true] %s86
      %s88 = sshll.u32 [#allocation11], 4
      %s89 = int_to_ptr.vmem [resolvable:$true] %s88
      %94 = dma.hbm_to_vmem [thread:$0]  %s87, 16384, %s89, [#allocation12], 256, 256, 16
    $region29: #{tpu_custom_call.1} parent=1 // pred_fallthru
      _
    // Predicated region
    $region30: #{tpu_custom_call.1} parent=1 // pred_check
      _
    $region31: #{tpu_custom_call.1} parent=1 // pred_check_branch
      %96 = sbr.rel (0) target = $region33
    $region32: #{tpu_custom_call.1} parent=1 // pred_region
      %98 = vsyncadd [#allocation12], 0
      %s100 = sshll.u32 %s7, 4
      %s101 = int_to_ptr.hbm [resolvable:$true] %s100
      %s102 = sshll.u32 [#allocation13], 4
      %s103 = int_to_ptr.vmem [resolvable:$true] %s102
      %105 = dma.hbm_to_vmem [thread:$0]  %s101, 64, %s103, [#allocation12]
    $region33: #{tpu_custom_call.1} parent=1 // pred_fallthru
      _
    // Predicated region
    $region34: #{tpu_custom_call.1} parent=1 // pred_check
      _
    $region35: #{tpu_custom_call.1} parent=1 // pred_check_branch
      %107 = sbr.rel (0) target = $region37
    $region36: #{tpu_custom_call.1} parent=1 // pred_region
      %109 = vsyncadd [#allocation15], 0
      %s110 = sshll.u32 %s8, 4
      %s111 = int_to_ptr.hbm [resolvable:$true] %s110
      %s112 = sshll.u32 [#allocation14], 4
      %s113 = int_to_ptr.vmem [resolvable:$true] %s112
      %118 = dma.hbm_to_vmem [thread:$0]  %s111, 4096, %s113, [#allocation15], 64, 64, 4
    $region37: #{tpu_custom_call.1} parent=1 // pred_fallthru
      _
    // Predicated region
    $region38: #{tpu_custom_call.1} parent=1 // pred_check
      _
    $region39: #{tpu_custom_call.1} parent=1 // pred_check_branch
      %120 = sbr.rel (0) target = $region41
    $region40: #{tpu_custom_call.1} parent=1 // pred_region
      _
    $region41: #{tpu_custom_call.1} parent=1 // pred_fallthru
      _
    // Predicated region
    $region42: #{tpu_custom_call.1} parent=1 // pred_check
      _
    $region43: #{tpu_custom_call.1} parent=1 // pred_check_branch
      %122 = sbr.rel (0) target = $region45
    $region44: #{tpu_custom_call.1} parent=1 // pred_region
      %124 = dma.done [#allocation3], 128
    $region45: #{tpu_custom_call.1} parent=1 // pred_fallthru
      _
    // Predicated region
    $region46: #{tpu_custom_call.1} parent=1 // pred_check
      _
    $region47: #{tpu_custom_call.1} parent=1 // pred_check_branch
      %126 = sbr.rel (0) target = $region49
    $region48: #{tpu_custom_call.1} parent=1 // pred_region
      %128 = dma.done [#allocation6], 16
    $region49: #{tpu_custom_call.1} parent=1 // pred_fallthru
      _
    // Predicated region
    $region50: #{tpu_custom_call.1} parent=1 // pred_check
      _
    $region51: #{tpu_custom_call.1} parent=1 // pred_check_branch
      %130 = sbr.rel (0) target = $region53
    $region52: #{tpu_custom_call.1} parent=1 // pred_region
      %132 = dma.done [#allocation6], 4096
    $region53: #{tpu_custom_call.1} parent=1 // pred_fallthru
      _
    // Predicated region
    $region54: #{tpu_custom_call.1} parent=1 // pred_check
      _
    $region55: #{tpu_custom_call.1} parent=1 // pred_check_branch
      %134 = sbr.rel (0) target = $region57
    $region56: #{tpu_custom_call.1} parent=1 // pred_region
      %136 = dma.done [#allocation9], 64
    $region57: #{tpu_custom_call.1} parent=1 // pred_fallthru
      _
    // Predicated region
    $region58: #{tpu_custom_call.1} parent=1 // pred_check
      _
    $region59: #{tpu_custom_call.1} parent=1 // pred_check_branch
      %138 = sbr.rel (0) target = $region61
    $region60: #{tpu_custom_call.1} parent=1 // pred_region
      %140 = dma.done [#allocation9], 16384
    $region61: #{tpu_custom_call.1} parent=1 // pred_fallthru
      _
    // Predicated region
    $region62: #{tpu_custom_call.1} parent=1 // pred_check
      _
    $region63: #{tpu_custom_call.1} parent=1 // pred_check_branch
      %142 = sbr.rel (0) target = $region65
    $region64: #{tpu_custom_call.1} parent=1 // pred_region
      %144 = dma.done [#allocation12], 16384
    $region65: #{tpu_custom_call.1} parent=1 // pred_fallthru
      _
    // Predicated region
    $region66: #{tpu_custom_call.1} parent=1 // pred_check
      _
    $region67: #{tpu_custom_call.1} parent=1 // pred_check_branch
      %146 = sbr.rel (0) target = $region69
    $region68: #{tpu_custom_call.1} parent=1 // pred_region
      %148 = dma.done [#allocation12], 64
    $region69: #{tpu_custom_call.1} parent=1 // pred_fallthru
      _
    // Predicated region
    $region70: #{tpu_custom_call.1} parent=1 // pred_check
      _
    $region71: #{tpu_custom_call.1} parent=1 // pred_check_branch
      %150 = sbr.rel (0) target = $region73
    $region72: #{tpu_custom_call.1} parent=1 // pred_region
      %152 = dma.done [#allocation15], 4096
    $region73: #{tpu_custom_call.1} parent=1 // pred_fallthru
      _
    %v153 = vld [vmem:[#allocation2] sm:$0xff]
    %v154 = vld [vmem:[#allocation5] sm:$0x1]
    %v155 = vld [vmem:[#allocation7] sm:$0xff]
    %v156 = vld [vmem:[#allocation7 + $0x8] sm:$0xff]
    %v157 = vld [vmem:[#allocation7 + $0x10] sm:$0xff]
    %v158 = vld [vmem:[#allocation7 + $0x18] sm:$0xff]
    %v159 = vld [vmem:[#allocation7 + $0x20] sm:$0xff]
    %v160 = vld [vmem:[#allocation7 + $0x28] sm:$0xff]
    %v161 = vld [vmem:[#allocation7 + $0x30] sm:$0xff]
    %v162 = vld [vmem:[#allocation7 + $0x38] sm:$0xff]
    %v163 = vld [vmem:[#allocation7 + $0x40] sm:$0xff]
    %v164 = vld [vmem:[#allocation7 + $0x48] sm:$0xff]
    %v165 = vld [vmem:[#allocation7 + $0x50] sm:$0xff]
    %v166 = vld [vmem:[#allocation7 + $0x58] sm:$0xff]
    %v167 = vld [vmem:[#allocation7 + $0x60] sm:$0xff]
    %v168 = vld [vmem:[#allocation7 + $0x68] sm:$0xff]
    %v169 = vld [vmem:[#allocation7 + $0x70] sm:$0xff]
    %v170 = vld [vmem:[#allocation7 + $0x78] sm:$0xff]
    %v171 = vld [vmem:[#allocation7 + $0x80] sm:$0xff]
    %v172 = vld [vmem:[#allocation7 + $0x88] sm:$0xff]
    %v173 = vld [vmem:[#allocation7 + $0x90] sm:$0xff]
    %v174 = vld [vmem:[#allocation7 + $0x98] sm:$0xff]
    %v175 = vld [vmem:[#allocation7 + $0xa0] sm:$0xff]
    %v176 = vld [vmem:[#allocation7 + $0xa8] sm:$0xff]
    %v177 = vld [vmem:[#allocation7 + $0xb0] sm:$0xff]
    %v178 = vld [vmem:[#allocation7 + $0xb8] sm:$0xff]
    %v179 = vld [vmem:[#allocation7 + $0xc0] sm:$0xff]
    %v180 = vld [vmem:[#allocation7 + $0xc8] sm:$0xff]
    %v181 = vld [vmem:[#allocation7 + $0xd0] sm:$0xff]
    %v182 = vld [vmem:[#allocation7 + $0xd8] sm:$0xff]
    %v183 = vld [vmem:[#allocation7 + $0xe0] sm:$0xff]
    %v184 = vld [vmem:[#allocation7 + $0xe8] sm:$0xff]
    %v185 = vld [vmem:[#allocation7 + $0xf0] sm:$0xff]
    %v186 = vld [vmem:[#allocation7 + $0xf8] sm:$0xff]
    %v187 = vld [vmem:[#allocation8] sm:$0xf]
    %v188 = vld [vmem:[#allocation10] sm:$0xff]
    %v189 = vld [vmem:[#allocation10 + $0x8] sm:$0xff]
    %v190 = vld [vmem:[#allocation10 + $0x10] sm:$0xff]
    %v191 = vld [vmem:[#allocation10 + $0x18] sm:$0xff]
    %v192 = vld [vmem:[#allocation10 + $0x20] sm:$0xff]
    %v193 = vld [vmem:[#allocation10 + $0x28] sm:$0xff]
    %v194 = vld [vmem:[#allocation10 + $0x30] sm:$0xff]
    %v195 = vld [vmem:[#allocation10 + $0x38] sm:$0xff]
    %v196 = vld [vmem:[#allocation10 + $0x40] sm:$0xff]
    %v197 = vld [vmem:[#allocation10 + $0x48] sm:$0xff]
    %v198 = vld [vmem:[#allocation10 + $0x50] sm:$0xff]
    %v199 = vld [vmem:[#allocation10 + $0x58] sm:$0xff]
    %v200 = vld [vmem:[#allocation10 + $0x60] sm:$0xff]
    %v201 = vld [vmem:[#allocation10 + $0x68] sm:$0xff]
    %v202 = vld [vmem:[#allocation10 + $0x70] sm:$0xff]
    %v203 = vld [vmem:[#allocation10 + $0x78] sm:$0xff]
    %v204 = vld [vmem:[#allocation10 + $0x80] sm:$0xff]
    %v205 = vld [vmem:[#allocation10 + $0x88] sm:$0xff]
    %v206 = vld [vmem:[#allocation10 + $0x90] sm:$0xff]
    %v207 = vld [vmem:[#allocation10 + $0x98] sm:$0xff]
    %v208 = vld [vmem:[#allocation10 + $0xa0] sm:$0xff]
    %v209 = vld [vmem:[#allocation10 + $0xa8] sm:$0xff]
    %v210 = vld [vmem:[#allocation10 + $0xb0] sm:$0xff]
    %v211 = vld [vmem:[#allocation10 + $0xb8] sm:$0xff]
    %v212 = vld [vmem:[#allocation10 + $0xc0] sm:$0xff]
    %v213 = vld [vmem:[#allocation10 + $0xc8] sm:$0xff]
    %v214 = vld [vmem:[#allocation10 + $0xd0] sm:$0xff]
    %v215 = vld [vmem:[#allocation10 + $0xd8] sm:$0xff]
    %v216 = vld [vmem:[#allocation10 + $0xe0] sm:$0xff]
    %v217 = vld [vmem:[#allocation10 + $0xe8] sm:$0xff]
    %v218 = vld [vmem:[#allocation10 + $0xf0] sm:$0xff]
    %v219 = vld [vmem:[#allocation10 + $0xf8] sm:$0xff]
    %v220 = vld [vmem:[#allocation10 + $0x100] sm:$0xff]
    %v221 = vld [vmem:[#allocation10 + $0x108] sm:$0xff]
    %v222 = vld [vmem:[#allocation10 + $0x110] sm:$0xff]
    %v223 = vld [vmem:[#allocation10 + $0x118] sm:$0xff]
    %v224 = vld [vmem:[#allocation10 + $0x120] sm:$0xff]
    %v225 = vld [vmem:[#allocation10 + $0x128] sm:$0xff]
    %v226 = vld [vmem:[#allocation10 + $0x130] sm:$0xff]
    %v227 = vld [vmem:[#allocation10 + $0x138] sm:$0xff]
    %v228 = vld [vmem:[#allocation10 + $0x140] sm:$0xff]
    %v229 = vld [vmem:[#allocation10 + $0x148] sm:$0xff]
    %v230 = vld [vmem:[#allocation10 + $0x150] sm:$0xff]
    %v231 = vld [vmem:[#allocation10 + $0x158] sm:$0xff]
    %v232 = vld [vmem:[#allocation10 + $0x160] sm:$0xff]
    %v233 = vld [vmem:[#allocation10 + $0x168] sm:$0xff]
    %v234 = vld [vmem:[#allocation10 + $0x170] sm:$0xff]
    %v235 = vld [vmem:[#allocation10 + $0x178] sm:$0xff]
    %v236 = vld [vmem:[#allocation10 + $0x180] sm:$0xff]
    %v237 = vld [vmem:[#allocation10 + $0x188] sm:$0xff]
    %v238 = vld [vmem:[#allocation10 + $0x190] sm:$0xff]
    %v239 = vld [vmem:[#allocation10 + $0x198] sm:$0xff]
    %v240 = vld [vmem:[#allocation10 + $0x1a0] sm:$0xff]
    %v241 = vld [vmem:[#allocation10 + $0x1a8] sm:$0xff]
    %v242 = vld [vmem:[#allocation10 + $0x1b0] sm:$0xff]
    %v243 = vld [vmem:[#allocation10 + $0x1b8] sm:$0xff]
    %v244 = vld [vmem:[#allocation10 + $0x1c0] sm:$0xff]
    %v245 = vld [vmem:[#allocation10 + $0x1c8] sm:$0xff]
    %v246 = vld [vmem:[#allocation10 + $0x1d0] sm:$0xff]
    %v247 = vld [vmem:[#allocation10 + $0x1d8] sm:$0xff]
    %v248 = vld [vmem:[#allocation10 + $0x1e0] sm:$0xff]
    %v249 = vld [vmem:[#allocation10 + $0x1e8] sm:$0xff]
    %v250 = vld [vmem:[#allocation10 + $0x1f0] sm:$0xff]
    %v251 = vld [vmem:[#allocation10 + $0x1f8] sm:$0xff]
    %v252 = vld [vmem:[#allocation10 + $0x200] sm:$0xff]
    %v253 = vld [vmem:[#allocation10 + $0x208] sm:$0xff]
    %v254 = vld [vmem:[#allocation10 + $0x210] sm:$0xff]
    %v255 = vld [vmem:[#allocation10 + $0x218] sm:$0xff]
    %v256 = vld [vmem:[#allocation10 + $0x220] sm:$0xff]
    %v257 = vld [vmem:[#allocation10 + $0x228] sm:$0xff]
    %v258 = vld [vmem:[#allocation10 + $0x230] sm:$0xff]
    %v259 = vld [vmem:[#allocation10 + $0x238] sm:$0xff]
    %v260 = vld [vmem:[#allocation10 + $0x240] sm:$0xff]
    %v261 = vld [vmem:[#allocation10 + $0x248] sm:$0xff]
    %v262 = vld [vmem:[#allocation10 + $0x250] sm:$0xff]
    %v263 = vld [vmem:[#allocation10 + $0x258] sm:$0xff]
    %v264 = vld [vmem:[#allocation10 + $0x260] sm:$0xff]
    %v265 = vld [vmem:[#allocation10 + $0x268] sm:$0xff]
    %v266 = vld [vmem:[#allocation10 + $0x270] sm:$0xff]
    %v267 = vld [vmem:[#allocation10 + $0x278] sm:$0xff]
    %v268 = vld [vmem:[#allocation10 + $0x280] sm:$0xff]
    %v269 = vld [vmem:[#allocation10 + $0x288] sm:$0xff]
    %v270 = vld [vmem:[#allocation10 + $0x290] sm:$0xff]
    %v271 = vld [vmem:[#allocation10 + $0x298] sm:$0xff]
    %v272 = vld [vmem:[#allocation10 + $0x2a0] sm:$0xff]
    %v273 = vld [vmem:[#allocation10 + $0x2a8] sm:$0xff]
    %v274 = vld [vmem:[#allocation10 + $0x2b0] sm:$0xff]
    %v275 = vld [vmem:[#allocation10 + $0x2b8] sm:$0xff]
    %v276 = vld [vmem:[#allocation10 + $0x2c0] sm:$0xff]
    %v277 = vld [vmem:[#allocation10 + $0x2c8] sm:$0xff]
    %v278 = vld [vmem:[#allocation10 + $0x2d0] sm:$0xff]
    %v279 = vld [vmem:[#allocation10 + $0x2d8] sm:$0xff]
    %v280 = vld [vmem:[#allocation10 + $0x2e0] sm:$0xff]
    %v281 = vld [vmem:[#allocation10 + $0x2e8] sm:$0xff]
    %v282 = vld [vmem:[#allocation10 + $0x2f0] sm:$0xff]
    %v283 = vld [vmem:[#allocation10 + $0x2f8] sm:$0xff]
    %v284 = vld [vmem:[#allocation10 + $0x300] sm:$0xff]
    %v285 = vld [vmem:[#allocation10 + $0x308] sm:$0xff]
    %v286 = vld [vmem:[#allocation10 + $0x310] sm:$0xff]
    %v287 = vld [vmem:[#allocation10 + $0x318] sm:$0xff]
    %v288 = vld [vmem:[#allocation10 + $0x320] sm:$0xff]
    %v289 = vld [vmem:[#allocation10 + $0x328] sm:$0xff]
    %v290 = vld [vmem:[#allocation10 + $0x330] sm:$0xff]
    %v291 = vld [vmem:[#allocation10 + $0x338] sm:$0xff]
    %v292 = vld [vmem:[#allocation10 + $0x340] sm:$0xff]
    %v293 = vld [vmem:[#allocation10 + $0x348] sm:$0xff]
    %v294 = vld [vmem:[#allocation10 + $0x350] sm:$0xff]
    %v295 = vld [vmem:[#allocation10 + $0x358] sm:$0xff]
    %v296 = vld [vmem:[#allocation10 + $0x360] sm:$0xff]
    %v297 = vld [vmem:[#allocation10 + $0x368] sm:$0xff]
    %v298 = vld [vmem:[#allocation10 + $0x370] sm:$0xff]
    %v299 = vld [vmem:[#allocation10 + $0x378] sm:$0xff]
    %v300 = vld [vmem:[#allocation10 + $0x380] sm:$0xff]
    %v301 = vld [vmem:[#allocation10 + $0x388] sm:$0xff]
    %v302 = vld [vmem:[#allocation10 + $0x390] sm:$0xff]
    %v303 = vld [vmem:[#allocation10 + $0x398] sm:$0xff]
    %v304 = vld [vmem:[#allocation10 + $0x3a0] sm:$0xff]
    %v305 = vld [vmem:[#allocation10 + $0x3a8] sm:$0xff]
    %v306 = vld [vmem:[#allocation10 + $0x3b0] sm:$0xff]
    %v307 = vld [vmem:[#allocation10 + $0x3b8] sm:$0xff]
    %v308 = vld [vmem:[#allocation10 + $0x3c0] sm:$0xff]
    %v309 = vld [vmem:[#allocation10 + $0x3c8] sm:$0xff]
    %v310 = vld [vmem:[#allocation10 + $0x3d0] sm:$0xff]
    %v311 = vld [vmem:[#allocation10 + $0x3d8] sm:$0xff]
    %v312 = vld [vmem:[#allocation10 + $0x3e0] sm:$0xff]
    %v313 = vld [vmem:[#allocation10 + $0x3e8] sm:$0xff]
    %v314 = vld [vmem:[#allocation10 + $0x3f0] sm:$0xff]
    %v315 = vld [vmem:[#allocation10 + $0x3f8] sm:$0xff]
    %v316 = vld [vmem:[%s5] sm:$0xf]
    %v317 = vld [vmem:[#allocation11] sm:$0xff]
    %v318 = vld [vmem:[#allocation11 + $0x8] sm:$0xff]
    %v319 = vld [vmem:[#allocation11 + $0x10] sm:$0xff]
    %v320 = vld [vmem:[#allocation11 + $0x18] sm:$0xff]
    %v321 = vld [vmem:[#allocation11 + $0x20] sm:$0xff]
    %v322 = vld [vmem:[#allocation11 + $0x28] sm:$0xff]
    %v323 = vld [vmem:[#allocation11 + $0x30] sm:$0xff]
    %v324 = vld [vmem:[#allocation11 + $0x38] sm:$0xff]
    %v325 = vld [vmem:[#allocation11 + $0x40] sm:$0xff]
    %v326 = vld [vmem:[#allocation11 + $0x48] sm:$0xff]
    %v327 = vld [vmem:[#allocation11 + $0x50] sm:$0xff]
    %v328 = vld [vmem:[#allocation11 + $0x58] sm:$0xff]
    %v329 = vld [vmem:[#allocation11 + $0x60] sm:$0xff]
    %v330 = vld [vmem:[#allocation11 + $0x68] sm:$0xff]
    %v331 = vld [vmem:[#allocation11 + $0x70] sm:$0xff]
    %v332 = vld [vmem:[#allocation11 + $0x78] sm:$0xff]
    %v333 = vld [vmem:[#allocation11 + $0x80] sm:$0xff]
    %v334 = vld [vmem:[#allocation11 + $0x88] sm:$0xff]
    %v335 = vld [vmem:[#allocation11 + $0x90] sm:$0xff]
    %v336 = vld [vmem:[#allocation11 + $0x98] sm:$0xff]
    %v337 = vld [vmem:[#allocation11 + $0xa0] sm:$0xff]
    %v338 = vld [vmem:[#allocation11 + $0xa8] sm:$0xff]
    %v339 = vld [vmem:[#allocation11 + $0xb0] sm:$0xff]
    %v340 = vld [vmem:[#allocation11 + $0xb8] sm:$0xff]
    %v341 = vld [vmem:[#allocation11 + $0xc0] sm:$0xff]
    %v342 = vld [vmem:[#allocation11 + $0xc8] sm:$0xff]
    %v343 = vld [vmem:[#allocation11 + $0xd0] sm:$0xff]
    %v344 = vld [vmem:[#allocation11 + $0xd8] sm:$0xff]
    %v345 = vld [vmem:[#allocation11 + $0xe0] sm:$0xff]
    %v346 = vld [vmem:[#allocation11 + $0xe8] sm:$0xff]
    %v347 = vld [vmem:[#allocation11 + $0xf0] sm:$0xff]
    %v348 = vld [vmem:[#allocation11 + $0xf8] sm:$0xff]
    %v349 = vld [vmem:[#allocation11 + $0x100] sm:$0xff]
    %v350 = vld [vmem:[#allocation11 + $0x108] sm:$0xff]
    %v351 = vld [vmem:[#allocation11 + $0x110] sm:$0xff]
    %v352 = vld [vmem:[#allocation11 + $0x118] sm:$0xff]
    %v353 = vld [vmem:[#allocation11 + $0x120] sm:$0xff]
    %v354 = vld [vmem:[#allocation11 + $0x128] sm:$0xff]
    %v355 = vld [vmem:[#allocation11 + $0x130] sm:$0xff]
    %v356 = vld [vmem:[#allocation11 + $0x138] sm:$0xff]
    %v357 = vld [vmem:[#allocation11 + $0x140] sm:$0xff]
    %v358 = vld [vmem:[#allocation11 + $0x148] sm:$0xff]
    %v359 = vld [vmem:[#allocation11 + $0x150] sm:$0xff]
    %v360 = vld [vmem:[#allocation11 + $0x158] sm:$0xff]
    %v361 = vld [vmem:[#allocation11 + $0x160] sm:$0xff]
    %v362 = vld [vmem:[#allocation11 + $0x168] sm:$0xff]
    %v363 = vld [vmem:[#allocation11 + $0x170] sm:$0xff]
    %v364 = vld [vmem:[#allocation11 + $0x178] sm:$0xff]
    %v365 = vld [vmem:[#allocation11 + $0x180] sm:$0xff]
    %v366 = vld [vmem:[#allocation11 + $0x188] sm:$0xff]
    %v367 = vld [vmem:[#allocation11 + $0x190] sm:$0xff]
    %v368 = vld [vmem:[#allocation11 + $0x198] sm:$0xff]
    %v369 = vld [vmem:[#allocation11 + $0x1a0] sm:$0xff]
    %v370 = vld [vmem:[#allocation11 + $0x1a8] sm:$0xff]
    %v371 = vld [vmem:[#allocation11 + $0x1b0] sm:$0xff]
    %v372 = vld [vmem:[#allocation11 + $0x1b8] sm:$0xff]
    %v373 = vld [vmem:[#allocation11 + $0x1c0] sm:$0xff]
    %v374 = vld [vmem:[#allocation11 + $0x1c8] sm:$0xff]
    %v375 = vld [vmem:[#allocation11 + $0x1d0] sm:$0xff]
    %v376 = vld [vmem:[#allocation11 + $0x1d8] sm:$0xff]
    %v377 = vld [vmem:[#allocation11 + $0x1e0] sm:$0xff]
    %v378 = vld [vmem:[#allocation11 + $0x1e8] sm:$0xff]
    %v379 = vld [vmem:[#allocation11 + $0x1f0] sm:$0xff]
    %v380 = vld [vmem:[#allocation11 + $0x1f8] sm:$0xff]
    %v381 = vld [vmem:[#allocation11 + $0x200] sm:$0xff]
    %v382 = vld [vmem:[#allocation11 + $0x208] sm:$0xff]
    %v383 = vld [vmem:[#allocation11 + $0x210] sm:$0xff]
    %v384 = vld [vmem:[#allocation11 + $0x218] sm:$0xff]
    %v385 = vld [vmem:[#allocation11 + $0x220] sm:$0xff]
    %v386 = vld [vmem:[#allocation11 + $0x228] sm:$0xff]
    %v387 = vld [vmem:[#allocation11 + $0x230] sm:$0xff]
    %v388 = vld [vmem:[#allocation11 + $0x238] sm:$0xff]
    %v389 = vld [vmem:[#allocation11 + $0x240] sm:$0xff]
    %v390 = vld [vmem:[#allocation11 + $0x248] sm:$0xff]
    %v391 = vld [vmem:[#allocation11 + $0x250] sm:$0xff]
    %v392 = vld [vmem:[#allocation11 + $0x258] sm:$0xff]
    %v393 = vld [vmem:[#allocation11 + $0x260] sm:$0xff]
    %v394 = vld [vmem:[#allocation11 + $0x268] sm:$0xff]
    %v395 = vld [vmem:[#allocation11 + $0x270] sm:$0xff]
    %v396 = vld [vmem:[#allocation11 + $0x278] sm:$0xff]
    %v397 = vld [vmem:[#allocation11 + $0x280] sm:$0xff]
    %v398 = vld [vmem:[#allocation11 + $0x288] sm:$0xff]
    %v399 = vld [vmem:[#allocation11 + $0x290] sm:$0xff]
    %v400 = vld [vmem:[#allocation11 + $0x298] sm:$0xff]
    %v401 = vld [vmem:[#allocation11 + $0x2a0] sm:$0xff]
    %v402 = vld [vmem:[#allocation11 + $0x2a8] sm:$0xff]
    %v403 = vld [vmem:[#allocation11 + $0x2b0] sm:$0xff]
    %v404 = vld [vmem:[#allocation11 + $0x2b8] sm:$0xff]
    %v405 = vld [vmem:[#allocation11 + $0x2c0] sm:$0xff]
    %v406 = vld [vmem:[#allocation11 + $0x2c8] sm:$0xff]
    %v407 = vld [vmem:[#allocation11 + $0x2d0] sm:$0xff]
    %v408 = vld [vmem:[#allocation11 + $0x2d8] sm:$0xff]
    %v409 = vld [vmem:[#allocation11 + $0x2e0] sm:$0xff]
    %v410 = vld [vmem:[#allocation11 + $0x2e8] sm:$0xff]
    %v411 = vld [vmem:[#allocation11 + $0x2f0] sm:$0xff]
    %v412 = vld [vmem:[#allocation11 + $0x2f8] sm:$0xff]
    %v413 = vld [vmem:[#allocation11 + $0x300] sm:$0xff]
    %v414 = vld [vmem:[#allocation11 + $0x308] sm:$0xff]
    %v415 = vld [vmem:[#allocation11 + $0x310] sm:$0xff]
    %v416 = vld [vmem:[#allocation11 + $0x318] sm:$0xff]
    %v417 = vld [vmem:[#allocation11 + $0x320] sm:$0xff]
    %v418 = vld [vmem:[#allocation11 + $0x328] sm:$0xff]
    %v419 = vld [vmem:[#allocation11 + $0x330] sm:$0xff]
    %v420 = vld [vmem:[#allocation11 + $0x338] sm:$0xff]
    %v421 = vld [vmem:[#allocation11 + $0x340] sm:$0xff]
    %v422 = vld [vmem:[#allocation11 + $0x348] sm:$0xff]
    %v423 = vld [vmem:[#allocation11 + $0x350] sm:$0xff]
    %v424 = vld [vmem:[#allocation11 + $0x358] sm:$0xff]
    %v425 = vld [vmem:[#allocation11 + $0x360] sm:$0xff]
    %v426 = vld [vmem:[#allocation11 + $0x368] sm:$0xff]
    %v427 = vld [vmem:[#allocation11 + $0x370] sm:$0xff]
    %v428 = vld [vmem:[#allocation11 + $0x378] sm:$0xff]
    %v429 = vld [vmem:[#allocation11 + $0x380] sm:$0xff]
    %v430 = vld [vmem:[#allocation11 + $0x388] sm:$0xff]
    %v431 = vld [vmem:[#allocation11 + $0x390] sm:$0xff]
    %v432 = vld [vmem:[#allocation11 + $0x398] sm:$0xff]
    %v433 = vld [vmem:[#allocation11 + $0x3a0] sm:$0xff]
    %v434 = vld [vmem:[#allocation11 + $0x3a8] sm:$0xff]
    %v435 = vld [vmem:[#allocation11 + $0x3b0] sm:$0xff]
    %v436 = vld [vmem:[#allocation11 + $0x3b8] sm:$0xff]
    %v437 = vld [vmem:[#allocation11 + $0x3c0] sm:$0xff]
    %v438 = vld [vmem:[#allocation11 + $0x3c8] sm:$0xff]
    %v439 = vld [vmem:[#allocation11 + $0x3d0] sm:$0xff]
    %v440 = vld [vmem:[#allocation11 + $0x3d8] sm:$0xff]
    %v441 = vld [vmem:[#allocation11 + $0x3e0] sm:$0xff]
    %v442 = vld [vmem:[#allocation11 + $0x3e8] sm:$0xff]
    %v443 = vld [vmem:[#allocation11 + $0x3f0] sm:$0xff]
    %v444 = vld [vmem:[#allocation11 + $0x3f8] sm:$0xff]
    %v445 = vld [vmem:[#allocation13] sm:$0xf]
    %v446 = vld [vmem:[#allocation14] sm:$0xf]
    %v447 = vld [vmem:[#allocation14 + $0x4] sm:$0xf]
    %v448 = vld [vmem:[#allocation14 + $0x8] sm:$0xf]
    %v449 = vld [vmem:[#allocation14 + $0xc] sm:$0xf]
    %v450 = vld [vmem:[#allocation14 + $0x10] sm:$0xf]
    %v451 = vld [vmem:[#allocation14 + $0x14] sm:$0xf]
    %v452 = vld [vmem:[#allocation14 + $0x18] sm:$0xf]
    %v453 = vld [vmem:[#allocation14 + $0x1c] sm:$0xf]
    %v454 = vld [vmem:[#allocation14 + $0x20] sm:$0xf]
    %v455 = vld [vmem:[#allocation14 + $0x24] sm:$0xf]
    %v456 = vld [vmem:[#allocation14 + $0x28] sm:$0xf]
    %v457 = vld [vmem:[#allocation14 + $0x2c] sm:$0xf]
    %v458 = vld [vmem:[#allocation14 + $0x30] sm:$0xf]
    %v459 = vld [vmem:[#allocation14 + $0x34] sm:$0xf]
    %v460 = vld [vmem:[#allocation14 + $0x38] sm:$0xf]
    %v461 = vld [vmem:[#allocation14 + $0x3c] sm:$0xf]
    %v462 = vld [vmem:[#allocation14 + $0x40] sm:$0xf]
    %v463 = vld [vmem:[#allocation14 + $0x44] sm:$0xf]
    %v464 = vld [vmem:[#allocation14 + $0x48] sm:$0xf]
    %v465 = vld [vmem:[#allocation14 + $0x4c] sm:$0xf]
    %v466 = vld [vmem:[#allocation14 + $0x50] sm:$0xf]
    %v467 = vld [vmem:[#allocation14 + $0x54] sm:$0xf]
    %v468 = vld [vmem:[#allocation14 + $0x58] sm:$0xf]
    %v469 = vld [vmem:[#allocation14 + $0x5c] sm:$0xf]
    %v470 = vld [vmem:[#allocation14 + $0x60] sm:$0xf]
    %v471 = vld [vmem:[#allocation14 + $0x64] sm:$0xf]
    %v472 = vld [vmem:[#allocation14 + $0x68] sm:$0xf]
    %v473 = vld [vmem:[#allocation14 + $0x6c] sm:$0xf]
    %v474 = vld [vmem:[#allocation14 + $0x70] sm:$0xf]
    %v475 = vld [vmem:[#allocation14 + $0x74] sm:$0xf]
    %v476 = vld [vmem:[#allocation14 + $0x78] sm:$0xf]
    %v477 = vld [vmem:[#allocation14 + $0x7c] sm:$0xf]
    %v478 = vld [vmem:[#allocation14 + $0x80] sm:$0xf]
    %v479 = vld [vmem:[#allocation14 + $0x84] sm:$0xf]
    %v480 = vld [vmem:[#allocation14 + $0x88] sm:$0xf]
    %v481 = vld [vmem:[#allocation14 + $0x8c] sm:$0xf]
    %v482 = vld [vmem:[#allocation14 + $0x90] sm:$0xf]
    %v483 = vld [vmem:[#allocation14 + $0x94] sm:$0xf]
    %v484 = vld [vmem:[#allocation14 + $0x98] sm:$0xf]
    %v485 = vld [vmem:[#allocation14 + $0x9c] sm:$0xf]
    %v486 = vld [vmem:[#allocation14 + $0xa0] sm:$0xf]
    %v487 = vld [vmem:[#allocation14 + $0xa4] sm:$0xf]
    %v488 = vld [vmem:[#allocation14 + $0xa8] sm:$0xf]
    %v489 = vld [vmem:[#allocation14 + $0xac] sm:$0xf]
    %v490 = vld [vmem:[#allocation14 + $0xb0] sm:$0xf]
    %v491 = vld [vmem:[#allocation14 + $0xb4] sm:$0xf]
    %v492 = vld [vmem:[#allocation14 + $0xb8] sm:$0xf]
    %v493 = vld [vmem:[#allocation14 + $0xbc] sm:$0xf]
    %v494 = vld [vmem:[#allocation14 + $0xc0] sm:$0xf]
    %v495 = vld [vmem:[#allocation14 + $0xc4] sm:$0xf]
    %v496 = vld [vmem:[#allocation14 + $0xc8] sm:$0xf]
    %v497 = vld [vmem:[#allocation14 + $0xcc] sm:$0xf]
    %v498 = vld [vmem:[#allocation14 + $0xd0] sm:$0xf]
    %v499 = vld [vmem:[#allocation14 + $0xd4] sm:$0xf]
    %v500 = vld [vmem:[#allocation14 + $0xd8] sm:$0xf]
    %v501 = vld [vmem:[#allocation14 + $0xdc] sm:$0xf]
    %v502 = vld [vmem:[#allocation14 + $0xe0] sm:$0xf]
    %v503 = vld [vmem:[#allocation14 + $0xe4] sm:$0xf]
    %v504 = vld [vmem:[#allocation14 + $0xe8] sm:$0xf]
    %v505 = vld [vmem:[#allocation14 + $0xec] sm:$0xf]
    %v506 = vld [vmem:[#allocation14 + $0xf0] sm:$0xf]
    %v507 = vld [vmem:[#allocation14 + $0xf4] sm:$0xf]
    %v508 = vld [vmem:[#allocation14 + $0xf8] sm:$0xf]
    %v509 = vld [vmem:[#allocation14 + $0xfc] sm:$0xf]
    %v510 = vld [vmem:[%s9] sm:$0x1]
    %v512 = vperm.slane %v154, 0
    %v514 = vmul.f32 %v153, %v512
    %v515 = vpack.c.bf16 %v153, %v153
    %v517 = vperm.slane %v187, 0
    %v518 = vperm.slane %v187, 1
    %v519 = vperm.slane %v187, 2
    %v520 = vperm.slane %v187, 3
    %v557 = vunpack.c.l.b16 %v155
    %v558 = vunpack.c.h.b16 %v155
    %v559 = vunpack.c.l.b16 %v156
    %v560 = vunpack.c.h.b16 %v156
    %v561 = vunpack.c.l.b16 %v157
    %v562 = vunpack.c.h.b16 %v157
    %v563 = vunpack.c.l.b16 %v158
    %v564 = vunpack.c.h.b16 %v158
    %v565 = vunpack.c.l.b16 %v159
    %v566 = vunpack.c.h.b16 %v159
    %v567 = vunpack.c.l.b16 %v160
    %v568 = vunpack.c.h.b16 %v160
    %v569 = vunpack.c.l.b16 %v161
    %v570 = vunpack.c.h.b16 %v161
    %v571 = vunpack.c.l.b16 %v162
    %v572 = vunpack.c.h.b16 %v162
    %v573 = vunpack.c.l.b16 %v163
    %v574 = vunpack.c.h.b16 %v163
    %v575 = vunpack.c.l.b16 %v164
    %v576 = vunpack.c.h.b16 %v164
    %v577 = vunpack.c.l.b16 %v165
    %v578 = vunpack.c.h.b16 %v165
    %v579 = vunpack.c.l.b16 %v166
    %v580 = vunpack.c.h.b16 %v166
    %v581 = vunpack.c.l.b16 %v167
    %v582 = vunpack.c.h.b16 %v167
    %v583 = vunpack.c.l.b16 %v168
    %v584 = vunpack.c.h.b16 %v168
    %v585 = vunpack.c.l.b16 %v169
    %v586 = vunpack.c.h.b16 %v169
    %v587 = vunpack.c.l.b16 %v170
    %v588 = vunpack.c.h.b16 %v170
    %v589 = vunpack.c.l.b16 %v171
    %v590 = vunpack.c.h.b16 %v171
    %v591 = vunpack.c.l.b16 %v172
    %v592 = vunpack.c.h.b16 %v172
    %v593 = vunpack.c.l.b16 %v173
    %v594 = vunpack.c.h.b16 %v173
    %v595 = vunpack.c.l.b16 %v174
    %v596 = vunpack.c.h.b16 %v174
    %v597 = vunpack.c.l.b16 %v175
    %v598 = vunpack.c.h.b16 %v175
    %v599 = vunpack.c.l.b16 %v176
    %v600 = vunpack.c.h.b16 %v176
    %v601 = vunpack.c.l.b16 %v177
    %v602 = vunpack.c.h.b16 %v177
    %v603 = vunpack.c.l.b16 %v178
    %v604 = vunpack.c.h.b16 %v178
    %v605 = vunpack.c.l.b16 %v179
    %v606 = vunpack.c.h.b16 %v179
    %v607 = vunpack.c.l.b16 %v180
    %v608 = vunpack.c.h.b16 %v180
    %v609 = vunpack.c.l.b16 %v181
    %v610 = vunpack.c.h.b16 %v181
    %v611 = vunpack.c.l.b16 %v182
    %v612 = vunpack.c.h.b16 %v182
    %v613 = vunpack.c.l.b16 %v183
    %v614 = vunpack.c.h.b16 %v183
    %v615 = vunpack.c.l.b16 %v184
    %v616 = vunpack.c.h.b16 %v184
    %v617 = vunpack.c.l.b16 %v185
    %v618 = vunpack.c.h.b16 %v185
    %v619 = vunpack.c.l.b16 %v186
    %v620 = vunpack.c.h.b16 %v186
    %v621 = vpack.c.b16 %v561, %v557
    %v622 = vpack.c.b16 %v562, %v558
    %v623 = vpack.c.b16 %v563, %v559
    %v624 = vpack.c.b16 %v564, %v560
    %v625 = vpack.c.b16 %v569, %v565
    %v626 = vpack.c.b16 %v570, %v566
    %v627 = vpack.c.b16 %v571, %v567
    %v628 = vpack.c.b16 %v572, %v568
    %v629 = vpack.c.b16 %v577, %v573
    %v630 = vpack.c.b16 %v578, %v574
    %v631 = vpack.c.b16 %v579, %v575
    %v632 = vpack.c.b16 %v580, %v576
    %v633 = vpack.c.b16 %v585, %v581
    %v634 = vpack.c.b16 %v586, %v582
    %v635 = vpack.c.b16 %v587, %v583
    %v636 = vpack.c.b16 %v588, %v584
    %v637 = vpack.c.b16 %v593, %v589
    %v638 = vpack.c.b16 %v594, %v590
    %v639 = vpack.c.b16 %v595, %v591
    %v640 = vpack.c.b16 %v596, %v592
    %v641 = vpack.c.b16 %v601, %v597
    %v642 = vpack.c.b16 %v602, %v598
    %v643 = vpack.c.b16 %v603, %v599
    %v644 = vpack.c.b16 %v604, %v600
    %v645 = vpack.c.b16 %v609, %v605
    %v646 = vpack.c.b16 %v610, %v606
    %v647 = vpack.c.b16 %v611, %v607
    %v648 = vpack.c.b16 %v612, %v608
    %v649 = vpack.c.b16 %v617, %v613
    %v650 = vpack.c.b16 %v618, %v614
    %v651 = vpack.c.b16 %v619, %v615
    %v652 = vpack.c.b16 %v620, %v616
    %685 = vmatpush.bf16.msra.mxu0 %v649
    %686 = vmatpush.bf16.msra.mxu0 %v645
    %687 = vmatpush.bf16.msra.mxu0 %v641
    %688 = vmatpush.bf16.msra.mxu0 %v637
    %689 = vmatpush.bf16.msra.mxu0 %v633
    %690 = vmatpush.bf16.msra.mxu0 %v629
    %691 = vmatpush.bf16.msra.mxu0 %v625
    %692 = vmatpush.bf16.msra.mxu0 %v621
    %693 = vmatmul.bf16.gmra.mxu0 %v515
    %v694 = vpop.f32.mrf.mxu0
    %v695 = vadd.f32 %v517, %v694
    %v696 = vpop.f32.mrf.mxu0
    %697 = vdwg.mxu0
    %698 = vmatpush.bf16.msra.mxu0 %v650
    %699 = vmatpush.bf16.msra.mxu0 %v646
    %700 = vmatpush.bf16.msra.mxu0 %v642
    %701 = vmatpush.bf16.msra.mxu0 %v638
    %702 = vmatpush.bf16.msra.mxu0 %v634
    %703 = vmatpush.bf16.msra.mxu0 %v630
    %704 = vmatpush.bf16.msra.mxu0 %v626
    %705 = vmatpush.bf16.msra.mxu0 %v622
    %706 = vmatmul.bf16.gmra.mxu0 %v515
    %v707 = vpop.f32.mrf.mxu0
    %v708 = vadd.f32 %v518, %v707
    %v709 = vpop.f32.mrf.mxu0
    %710 = vdwg.mxu0
    %711 = vmatpush.bf16.msra.mxu0 %v651
    %712 = vmatpush.bf16.msra.mxu0 %v647
    %713 = vmatpush.bf16.msra.mxu0 %v643
    %714 = vmatpush.bf16.msra.mxu0 %v639
    %715 = vmatpush.bf16.msra.mxu0 %v635
    %716 = vmatpush.bf16.msra.mxu0 %v631
    %717 = vmatpush.bf16.msra.mxu0 %v627
    %718 = vmatpush.bf16.msra.mxu0 %v623
    %719 = vmatmul.bf16.gmra.mxu0 %v515
    %v720 = vpop.f32.mrf.mxu0
    %v721 = vadd.f32 %v519, %v720
    %v722 = vpop.f32.mrf.mxu0
    %723 = vdwg.mxu0
    %724 = vmatpush.bf16.msra.mxu0 %v652
    %725 = vmatpush.bf16.msra.mxu0 %v648
    %726 = vmatpush.bf16.msra.mxu0 %v644
    %727 = vmatpush.bf16.msra.mxu0 %v640
    %728 = vmatpush.bf16.msra.mxu0 %v636
    %729 = vmatpush.bf16.msra.mxu0 %v632
    %730 = vmatpush.bf16.msra.mxu0 %v628
    %731 = vmatpush.bf16.msra.mxu0 %v624
    %732 = vmatmul.bf16.gmra.mxu0 %v515
    %v733 = vpop.f32.mrf.mxu0
    %v734 = vadd.f32 %v520, %v733
    %v735 = vpop.f32.mrf.mxu0
    %736 = vdwg.mxu0
    %v737 = vmul.f32 %v695, 0.5
    %v738 = vmul.f32 %v708, 0.5
    %v739 = vmul.f32 %v721, 0.5
    %v740 = vmul.f32 %v734, 0.5
    %v741 = vtanh.pop %v737
    %v742 = vtanh.pop %v738
    %v743 = vtanh.pop %v739
    %v744 = vtanh.pop %v740
    %v745 = vmul.f32 %v741, 0.5
    %v746 = vmul.f32 %v742, 0.5
    %v747 = vmul.f32 %v743, 0.5
    %v748 = vmul.f32 %v744, 0.5
    %v749 = vadd.f32 %v745, 0.5
    %v750 = vadd.f32 %v746, 0.5
    %v751 = vadd.f32 %v747, 0.5
    %v752 = vadd.f32 %v748, 0.5
    %v753 = vpack.c.bf16 %v749, %v749
    %v754 = vpack.c.bf16 %v750, %v750
    %v755 = vpack.c.bf16 %v751, %v751
    %v756 = vpack.c.bf16 %v752, %v752
    %v758 = vperm.slane %v316, 0
    %v759 = vperm.slane %v316, 1
    %v760 = vperm.slane %v316, 2
    %v761 = vperm.slane %v316, 3
    %v894 = vunpack.c.l.b16 %v188
    %v895 = vunpack.c.h.b16 %v188
    %v896 = vunpack.c.l.b16 %v189
    %v897 = vunpack.c.h.b16 %v189
    %v898 = vunpack.c.l.b16 %v190
    %v899 = vunpack.c.h.b16 %v190
    %v900 = vunpack.c.l.b16 %v191
    %v901 = vunpack.c.h.b16 %v191
    %v902 = vunpack.c.l.b16 %v192
    %v903 = vunpack.c.h.b16 %v192
    %v904 = vunpack.c.l.b16 %v193
    %v905 = vunpack.c.h.b16 %v193
    %v906 = vunpack.c.l.b16 %v194
    %v907 = vunpack.c.h.b16 %v194
    %v908 = vunpack.c.l.b16 %v195
    %v909 = vunpack.c.h.b16 %v195
    %v910 = vunpack.c.l.b16 %v196
    %v911 = vunpack.c.h.b16 %v196
    %v912 = vunpack.c.l.b16 %v197
    %v913 = vunpack.c.h.b16 %v197
    %v914 = vunpack.c.l.b16 %v198
    %v915 = vunpack.c.h.b16 %v198
    %v916 = vunpack.c.l.b16 %v199
    %v917 = vunpack.c.h.b16 %v199
    %v918 = vunpack.c.l.b16 %v200
    %v919 = vunpack.c.h.b16 %v200
    %v920 = vunpack.c.l.b16 %v201
    %v921 = vunpack.c.h.b16 %v201
    %v922 = vunpack.c.l.b16 %v202
    %v923 = vunpack.c.h.b16 %v202
    %v924 = vunpack.c.l.b16 %v203
    %v925 = vunpack.c.h.b16 %v203
    %v926 = vunpack.c.l.b16 %v204
    %v927 = vunpack.c.h.b16 %v204
    %v928 = vunpack.c.l.b16 %v205
    %v929 = vunpack.c.h.b16 %v205
    %v930 = vunpack.c.l.b16 %v206
    %v931 = vunpack.c.h.b16 %v206
    %v932 = vunpack.c.l.b16 %v207
    %v933 = vunpack.c.h.b16 %v207
    %v934 = vunpack.c.l.b16 %v208
    %v935 = vunpack.c.h.b16 %v208
    %v936 = vunpack.c.l.b16 %v209
    %v937 = vunpack.c.h.b16 %v209
    %v938 = vunpack.c.l.b16 %v210
    %v939 = vunpack.c.h.b16 %v210
    %v940 = vunpack.c.l.b16 %v211
    %v941 = vunpack.c.h.b16 %v211
    %v942 = vunpack.c.l.b16 %v212
    %v943 = vunpack.c.h.b16 %v212
    %v944 = vunpack.c.l.b16 %v213
    %v945 = vunpack.c.h.b16 %v213
    %v946 = vunpack.c.l.b16 %v214
    %v947 = vunpack.c.h.b16 %v214
    %v948 = vunpack.c.l.b16 %v215
    %v949 = vunpack.c.h.b16 %v215
    %v950 = vunpack.c.l.b16 %v216
    %v951 = vunpack.c.h.b16 %v216
    %v952 = vunpack.c.l.b16 %v217
    %v953 = vunpack.c.h.b16 %v217
    %v954 = vunpack.c.l.b16 %v218
    %v955 = vunpack.c.h.b16 %v218
    %v956 = vunpack.c.l.b16 %v219
    %v957 = vunpack.c.h.b16 %v219
    %v958 = vunpack.c.l.b16 %v220
    %v959 = vunpack.c.h.b16 %v220
    %v960 = vunpack.c.l.b16 %v221
    %v961 = vunpack.c.h.b16 %v221
    %v962 = vunpack.c.l.b16 %v222
    %v963 = vunpack.c.h.b16 %v222
    %v964 = vunpack.c.l.b16 %v223
    %v965 = vunpack.c.h.b16 %v223
    %v966 = vunpack.c.l.b16 %v224
    %v967 = vunpack.c.h.b16 %v224
    %v968 = vunpack.c.l.b16 %v225
    %v969 = vunpack.c.h.b16 %v225
    %v970 = vunpack.c.l.b16 %v226
    %v971 = vunpack.c.h.b16 %v226
    %v972 = vunpack.c.l.b16 %v227
    %v973 = vunpack.c.h.b16 %v227
    %v974 = vunpack.c.l.b16 %v228
    %v975 = vunpack.c.h.b16 %v228
    %v976 = vunpack.c.l.b16 %v229
    %v977 = vunpack.c.h.b16 %v229
    %v978 = vunpack.c.l.b16 %v230
    %v979 = vunpack.c.h.b16 %v230
    %v980 = vunpack.c.l.b16 %v231
    %v981 = vunpack.c.h.b16 %v231
    %v982 = vunpack.c.l.b16 %v232
    %v983 = vunpack.c.h.b16 %v232
    %v984 = vunpack.c.l.b16 %v233
    %v985 = vunpack.c.h.b16 %v233
    %v986 = vunpack.c.l.b16 %v234
    %v987 = vunpack.c.h.b16 %v234
    %v988 = vunpack.c.l.b16 %v235
    %v989 = vunpack.c.h.b16 %v235
    %v990 = vunpack.c.l.b16 %v236
    %v991 = vunpack.c.h.b16 %v236
    %v992 = vunpack.c.l.b16 %v237
    %v993 = vunpack.c.h.b16 %v237
    %v994 = vunpack.c.l.b16 %v238
    %v995 = vunpack.c.h.b16 %v238
    %v996 = vunpack.c.l.b16 %v239
    %v997 = vunpack.c.h.b16 %v239
    %v998 = vunpack.c.l.b16 %v240
    %v999 = vunpack.c.h.b16 %v240
    %v1000 = vunpack.c.l.b16 %v241
    %v1001 = vunpack.c.h.b16 %v241
    %v1002 = vunpack.c.l.b16 %v242
    %v1003 = vunpack.c.h.b16 %v242
    %v1004 = vunpack.c.l.b16 %v243
    %v1005 = vunpack.c.h.b16 %v243
    %v1006 = vunpack.c.l.b16 %v244
    %v1007 = vunpack.c.h.b16 %v244
    %v1008 = vunpack.c.l.b16 %v245
    %v1009 = vunpack.c.h.b16 %v245
    %v1010 = vunpack.c.l.b16 %v246
    %v1011 = vunpack.c.h.b16 %v246
    %v1012 = vunpack.c.l.b16 %v247
    %v1013 = vunpack.c.h.b16 %v247
    %v1014 = vunpack.c.l.b16 %v248
    %v1015 = vunpack.c.h.b16 %v248
    %v1016 = vunpack.c.l.b16 %v249
    %v1017 = vunpack.c.h.b16 %v249
    %v1018 = vunpack.c.l.b16 %v250
    %v1019 = vunpack.c.h.b16 %v250
    %v1020 = vunpack.c.l.b16 %v251
    %v1021 = vunpack.c.h.b16 %v251
    %v1022 = vunpack.c.l.b16 %v252
    %v1023 = vunpack.c.h.b16 %v252
    %v1024 = vunpack.c.l.b16 %v253
    %v1025 = vunpack.c.h.b16 %v253
    %v1026 = vunpack.c.l.b16 %v254
    %v1027 = vunpack.c.h.b16 %v254
    %v1028 = vunpack.c.l.b16 %v255
    %v1029 = vunpack.c.h.b16 %v255
    %v1030 = vunpack.c.l.b16 %v256
    %v1031 = vunpack.c.h.b16 %v256
    %v1032 = vunpack.c.l.b16 %v257
    %v1033 = vunpack.c.h.b16 %v257
    %v1034 = vunpack.c.l.b16 %v258
    %v1035 = vunpack.c.h.b16 %v258
    %v1036 = vunpack.c.l.b16 %v259
    %v1037 = vunpack.c.h.b16 %v259
    %v1038 = vunpack.c.l.b16 %v260
    %v1039 = vunpack.c.h.b16 %v260
    %v1040 = vunpack.c.l.b16 %v261
    %v1041 = vunpack.c.h.b16 %v261
    %v1042 = vunpack.c.l.b16 %v262
    %v1043 = vunpack.c.h.b16 %v262
    %v1044 = vunpack.c.l.b16 %v263
    %v1045 = vunpack.c.h.b16 %v263
    %v1046 = vunpack.c.l.b16 %v264
    %v1047 = vunpack.c.h.b16 %v264
    %v1048 = vunpack.c.l.b16 %v265
    %v1049 = vunpack.c.h.b16 %v265
    %v1050 = vunpack.c.l.b16 %v266
    %v1051 = vunpack.c.h.b16 %v266
    %v1052 = vunpack.c.l.b16 %v267
    %v1053 = vunpack.c.h.b16 %v267
    %v1054 = vunpack.c.l.b16 %v268
    %v1055 = vunpack.c.h.b16 %v268
    %v1056 = vunpack.c.l.b16 %v269
    %v1057 = vunpack.c.h.b16 %v269
    %v1058 = vunpack.c.l.b16 %v270
    %v1059 = vunpack.c.h.b16 %v270
    %v1060 = vunpack.c.l.b16 %v271
    %v1061 = vunpack.c.h.b16 %v271
    %v1062 = vunpack.c.l.b16 %v272
    %v1063 = vunpack.c.h.b16 %v272
    %v1064 = vunpack.c.l.b16 %v273
    %v1065 = vunpack.c.h.b16 %v273
    %v1066 = vunpack.c.l.b16 %v274
    %v1067 = vunpack.c.h.b16 %v274
    %v1068 = vunpack.c.l.b16 %v275
    %v1069 = vunpack.c.h.b16 %v275
    %v1070 = vunpack.c.l.b16 %v276
    %v1071 = vunpack.c.h.b16 %v276
    %v1072 = vunpack.c.l.b16 %v277
    %v1073 = vunpack.c.h.b16 %v277
    %v1074 = vunpack.c.l.b16 %v278
    %v1075 = vunpack.c.h.b16 %v278
    %v1076 = vunpack.c.l.b16 %v279
    %v1077 = vunpack.c.h.b16 %v279
    %v1078 = vunpack.c.l.b16 %v280
    %v1079 = vunpack.c.h.b16 %v280
    %v1080 = vunpack.c.l.b16 %v281
    %v1081 = vunpack.c.h.b16 %v281
    %v1082 = vunpack.c.l.b16 %v282
    %v1083 = vunpack.c.h.b16 %v282
    %v1084 = vunpack.c.l.b16 %v283
    %v1085 = vunpack.c.h.b16 %v283
    %v1086 = vunpack.c.l.b16 %v284
    %v1087 = vunpack.c.h.b16 %v284
    %v1088 = vunpack.c.l.b16 %v285
    %v1089 = vunpack.c.h.b16 %v285
    %v1090 = vunpack.c.l.b16 %v286
    %v1091 = vunpack.c.h.b16 %v286
    %v1092 = vunpack.c.l.b16 %v287
    %v1093 = vunpack.c.h.b16 %v287
    %v1094 = vunpack.c.l.b16 %v288
    %v1095 = vunpack.c.h.b16 %v288
    %v1096 = vunpack.c.l.b16 %v289
    %v1097 = vunpack.c.h.b16 %v289
    %v1098 = vunpack.c.l.b16 %v290
    %v1099 = vunpack.c.h.b16 %v290
    %v1100 = vunpack.c.l.b16 %v291
    %v1101 = vunpack.c.h.b16 %v291
    %v1102 = vunpack.c.l.b16 %v292
    %v1103 = vunpack.c.h.b16 %v292
    %v1104 = vunpack.c.l.b16 %v293
    %v1105 = vunpack.c.h.b16 %v293
    %v1106 = vunpack.c.l.b16 %v294
    %v1107 = vunpack.c.h.b16 %v294
    %v1108 = vunpack.c.l.b16 %v295
    %v1109 = vunpack.c.h.b16 %v295
    %v1110 = vunpack.c.l.b16 %v296
    %v1111 = vunpack.c.h.b16 %v296
    %v1112 = vunpack.c.l.b16 %v297
    %v1113 = vunpack.c.h.b16 %v297
    %v1114 = vunpack.c.l.b16 %v298
    %v1115 = vunpack.c.h.b16 %v298
    %v1116 = vunpack.c.l.b16 %v299
    %v1117 = vunpack.c.h.b16 %v299
    %v1118 = vunpack.c.l.b16 %v300
    %v1119 = vunpack.c.h.b16 %v300
    %v1120 = vunpack.c.l.b16 %v301
    %v1121 = vunpack.c.h.b16 %v301
    %v1122 = vunpack.c.l.b16 %v302
    %v1123 = vunpack.c.h.b16 %v302
    %v1124 = vunpack.c.l.b16 %v303
    %v1125 = vunpack.c.h.b16 %v303
    %v1126 = vunpack.c.l.b16 %v304
    %v1127 = vunpack.c.h.b16 %v304
    %v1128 = vunpack.c.l.b16 %v305
    %v1129 = vunpack.c.h.b16 %v305
    %v1130 = vunpack.c.l.b16 %v306
    %v1131 = vunpack.c.h.b16 %v306
    %v1132 = vunpack.c.l.b16 %v307
    %v1133 = vunpack.c.h.b16 %v307
    %v1134 = vunpack.c.l.b16 %v308
    %v1135 = vunpack.c.h.b16 %v308
    %v1136 = vunpack.c.l.b16 %v309
    %v1137 = vunpack.c.h.b16 %v309
    %v1138 = vunpack.c.l.b16 %v310
    %v1139 = vunpack.c.h.b16 %v310
    %v1140 = vunpack.c.l.b16 %v311
    %v1141 = vunpack.c.h.b16 %v311
    %v1142 = vunpack.c.l.b16 %v312
    %v1143 = vunpack.c.h.b16 %v312
    %v1144 = vunpack.c.l.b16 %v313
    %v1145 = vunpack.c.h.b16 %v313
    %v1146 = vunpack.c.l.b16 %v314
    %v1147 = vunpack.c.h.b16 %v314
    %v1148 = vunpack.c.l.b16 %v315
    %v1149 = vunpack.c.h.b16 %v315
    %v1150 = vpack.c.b16 %v898, %v894
    %v1151 = vpack.c.b16 %v899, %v895
    %v1152 = vpack.c.b16 %v900, %v896
    %v1153 = vpack.c.b16 %v901, %v897
    %v1154 = vpack.c.b16 %v906, %v902
    %v1155 = vpack.c.b16 %v907, %v903
    %v1156 = vpack.c.b16 %v908, %v904
    %v1157 = vpack.c.b16 %v909, %v905
    %v1158 = vpack.c.b16 %v914, %v910
    %v1159 = vpack.c.b16 %v915, %v911
    %v1160 = vpack.c.b16 %v916, %v912
    %v1161 = vpack.c.b16 %v917, %v913
    %v1162 = vpack.c.b16 %v922, %v918
    %v1163 = vpack.c.b16 %v923, %v919
    %v1164 = vpack.c.b16 %v924, %v920
    %v1165 = vpack.c.b16 %v925, %v921
    %v1166 = vpack.c.b16 %v930, %v926
    %v1167 = vpack.c.b16 %v931, %v927
    %v1168 = vpack.c.b16 %v932, %v928
    %v1169 = vpack.c.b16 %v933, %v929
    %v1170 = vpack.c.b16 %v938, %v934
    %v1171 = vpack.c.b16 %v939, %v935
    %v1172 = vpack.c.b16 %v940, %v936
    %v1173 = vpack.c.b16 %v941, %v937
    %v1174 = vpack.c.b16 %v946, %v942
    %v1175 = vpack.c.b16 %v947, %v943
    %v1176 = vpack.c.b16 %v948, %v944
    %v1177 = vpack.c.b16 %v949, %v945
    %v1178 = vpack.c.b16 %v954, %v950
    %v1179 = vpack.c.b16 %v955, %v951
    %v1180 = vpack.c.b16 %v956, %v952
    %v1181 = vpack.c.b16 %v957, %v953
    %v1182 = vpack.c.b16 %v962, %v958
    %v1183 = vpack.c.b16 %v963, %v959
    %v1184 = vpack.c.b16 %v964, %v960
    %v1185 = vpack.c.b16 %v965, %v961
    %v1186 = vpack.c.b16 %v970, %v966
    %v1187 = vpack.c.b16 %v971, %v967
    %v1188 = vpack.c.b16 %v972, %v968
    %v1189 = vpack.c.b16 %v973, %v969
    %v1190 = vpack.c.b16 %v978, %v974
    %v1191 = vpack.c.b16 %v979, %v975
    %v1192 = vpack.c.b16 %v980, %v976
    %v1193 = vpack.c.b16 %v981, %v977
    %v1194 = vpack.c.b16 %v986, %v982
    %v1195 = vpack.c.b16 %v987, %v983
    %v1196 = vpack.c.b16 %v988, %v984
    %v1197 = vpack.c.b16 %v989, %v985
    %v1198 = vpack.c.b16 %v994, %v990
    %v1199 = vpack.c.b16 %v995, %v991
    %v1200 = vpack.c.b16 %v996, %v992
    %v1201 = vpack.c.b16 %v997, %v993
    %v1202 = vpack.c.b16 %v1002, %v998
    %v1203 = vpack.c.b16 %v1003, %v999
    %v1204 = vpack.c.b16 %v1004, %v1000
    %v1205 = vpack.c.b16 %v1005, %v1001
    %v1206 = vpack.c.b16 %v1010, %v1006
    %v1207 = vpack.c.b16 %v1011, %v1007
    %v1208 = vpack.c.b16 %v1012, %v1008
    %v1209 = vpack.c.b16 %v1013, %v1009
    %v1210 = vpack.c.b16 %v1018, %v1014
    %v1211 = vpack.c.b16 %v1019, %v1015
    %v1212 = vpack.c.b16 %v1020, %v1016
    %v1213 = vpack.c.b16 %v1021, %v1017
    %v1214 = vpack.c.b16 %v1026, %v1022
    %v1215 = vpack.c.b16 %v1027, %v1023
    %v1216 = vpack.c.b16 %v1028, %v1024
    %v1217 = vpack.c.b16 %v1029, %v1025
    %v1218 = vpack.c.b16 %v1034, %v1030
    %v1219 = vpack.c.b16 %v1035, %v1031
    %v1220 = vpack.c.b16 %v1036, %v1032
    %v1221 = vpack.c.b16 %v1037, %v1033
    %v1222 = vpack.c.b16 %v1042, %v1038
    %v1223 = vpack.c.b16 %v1043, %v1039
    %v1224 = vpack.c.b16 %v1044, %v1040
    %v1225 = vpack.c.b16 %v1045, %v1041
    %v1226 = vpack.c.b16 %v1050, %v1046
    %v1227 = vpack.c.b16 %v1051, %v1047
    %v1228 = vpack.c.b16 %v1052, %v1048
    %v1229 = vpack.c.b16 %v1053, %v1049
    %v1230 = vpack.c.b16 %v1058, %v1054
    %v1231 = vpack.c.b16 %v1059, %v1055
    %v1232 = vpack.c.b16 %v1060, %v1056
    %v1233 = vpack.c.b16 %v1061, %v1057
    %v1234 = vpack.c.b16 %v1066, %v1062
    %v1235 = vpack.c.b16 %v1067, %v1063
    %v1236 = vpack.c.b16 %v1068, %v1064
    %v1237 = vpack.c.b16 %v1069, %v1065
    %v1238 = vpack.c.b16 %v1074, %v1070
    %v1239 = vpack.c.b16 %v1075, %v1071
    %v1240 = vpack.c.b16 %v1076, %v1072
    %v1241 = vpack.c.b16 %v1077, %v1073
    %v1242 = vpack.c.b16 %v1082, %v1078
    %v1243 = vpack.c.b16 %v1083, %v1079
    %v1244 = vpack.c.b16 %v1084, %v1080
    %v1245 = vpack.c.b16 %v1085, %v1081
    %v1246 = vpack.c.b16 %v1090, %v1086
    %v1247 = vpack.c.b16 %v1091, %v1087
    %v1248 = vpack.c.b16 %v1092, %v1088
    %v1249 = vpack.c.b16 %v1093, %v1089
    %v1250 = vpack.c.b16 %v1098, %v1094
    %v1251 = vpack.c.b16 %v1099, %v1095
    %v1252 = vpack.c.b16 %v1100, %v1096
    %v1253 = vpack.c.b16 %v1101, %v1097
    %v1254 = vpack.c.b16 %v1106, %v1102
    %v1255 = vpack.c.b16 %v1107, %v1103
    %v1256 = vpack.c.b16 %v1108, %v1104
    %v1257 = vpack.c.b16 %v1109, %v1105
    %v1258 = vpack.c.b16 %v1114, %v1110
    %v1259 = vpack.c.b16 %v1115, %v1111
    %v1260 = vpack.c.b16 %v1116, %v1112
    %v1261 = vpack.c.b16 %v1117, %v1113
    %v1262 = vpack.c.b16 %v1122, %v1118
    %v1263 = vpack.c.b16 %v1123, %v1119
    %v1264 = vpack.c.b16 %v1124, %v1120
    %v1265 = vpack.c.b16 %v1125, %v1121
    %v1266 = vpack.c.b16 %v1130, %v1126
    %v1267 = vpack.c.b16 %v1131, %v1127
    %v1268 = vpack.c.b16 %v1132, %v1128
    %v1269 = vpack.c.b16 %v1133, %v1129
    %v1270 = vpack.c.b16 %v1138, %v1134
    %v1271 = vpack.c.b16 %v1139, %v1135
    %v1272 = vpack.c.b16 %v1140, %v1136
    %v1273 = vpack.c.b16 %v1141, %v1137
    %v1274 = vpack.c.b16 %v1146, %v1142
    %v1275 = vpack.c.b16 %v1147, %v1143
    %v1276 = vpack.c.b16 %v1148, %v1144
    %v1277 = vpack.c.b16 %v1149, %v1145
    %1406 = vmatpush.bf16.msra.mxu0 %v1178
    %1407 = vmatpush.bf16.msra.mxu0 %v1174
    %1408 = vmatpush.bf16.msra.mxu0 %v1170
    %1409 = vmatpush.bf16.msra.mxu0 %v1166
    %1410 = vmatpush.bf16.msra.mxu0 %v1162
    %1411 = vmatpush.bf16.msra.mxu0 %v1158
    %1412 = vmatpush.bf16.msra.mxu0 %v1154
    %1413 = vmatpush.bf16.msra.mxu0 %v1150
    %1414 = vmatmul.bf16.gmra.mxu0 %v753
    %v1415 = vpop.f32.mrf.mxu0
    %v1416 = vadd.f32 %v758, %v1415
    %v1417 = vpop.f32.mrf.mxu0
    %1418 = vdwg.mxu0
    %1419 = vmatpush.bf16.msra.mxu0 %v1210
    %1420 = vmatpush.bf16.msra.mxu0 %v1206
    %1421 = vmatpush.bf16.msra.mxu0 %v1202
    %1422 = vmatpush.bf16.msra.mxu0 %v1198
    %1423 = vmatpush.bf16.msra.mxu0 %v1194
    %1424 = vmatpush.bf16.msra.mxu0 %v1190
    %1425 = vmatpush.bf16.msra.mxu0 %v1186
    %1426 = vmatpush.bf16.msra.mxu0 %v1182
    %1427 = vmatmul.bf16.gmra.mxu0 %v754
    %v1428 = vpop.f32.mrf.mxu0
    %v1429 = vadd.f32 %v1416, %v1428
    %v1430 = vpop.f32.mrf.mxu0
    %1431 = vdwg.mxu0
    %1432 = vmatpush.bf16.msra.mxu0 %v1242
    %1433 = vmatpush.bf16.msra.mxu0 %v1238
    %1434 = vmatpush.bf16.msra.mxu0 %v1234
    %1435 = vmatpush.bf16.msra.mxu0 %v1230
    %1436 = vmatpush.bf16.msra.mxu0 %v1226
    %1437 = vmatpush.bf16.msra.mxu0 %v1222
    %1438 = vmatpush.bf16.msra.mxu0 %v1218
    %1439 = vmatpush.bf16.msra.mxu0 %v1214
    %1440 = vmatmul.bf16.gmra.mxu0 %v755
    %v1441 = vpop.f32.mrf.mxu0
    %v1442 = vadd.f32 %v1429, %v1441
    %v1443 = vpop.f32.mrf.mxu0
    %1444 = vdwg.mxu0
    %1445 = vmatpush.bf16.msra.mxu0 %v1274
    %1446 = vmatpush.bf16.msra.mxu0 %v1270
    %1447 = vmatpush.bf16.msra.mxu0 %v1266
    %1448 = vmatpush.bf16.msra.mxu0 %v1262
    %1449 = vmatpush.bf16.msra.mxu0 %v1258
    %1450 = vmatpush.bf16.msra.mxu0 %v1254
    %1451 = vmatpush.bf16.msra.mxu0 %v1250
    %1452 = vmatpush.bf16.msra.mxu0 %v1246
    %1453 = vmatmul.bf16.gmra.mxu0 %v756
    %v1454 = vpop.f32.mrf.mxu0
    %v1455 = vadd.f32 %v1442, %v1454
    %v1456 = vpop.f32.mrf.mxu0
    %1457 = vdwg.mxu0
    %1458 = vmatpush.bf16.msra.mxu0 %v1179
    %1459 = vmatpush.bf16.msra.mxu0 %v1175
    %1460 = vmatpush.bf16.msra.mxu0 %v1171
    %1461 = vmatpush.bf16.msra.mxu0 %v1167
    %1462 = vmatpush.bf16.msra.mxu0 %v1163
    %1463 = vmatpush.bf16.msra.mxu0 %v1159
    %1464 = vmatpush.bf16.msra.mxu0 %v1155
    %1465 = vmatpush.bf16.msra.mxu0 %v1151
    %1466 = vmatmul.bf16.gmra.mxu0 %v753
    %v1467 = vpop.f32.mrf.mxu0
    %v1468 = vadd.f32 %v759, %v1467
    %v1469 = vpop.f32.mrf.mxu0
    %1470 = vdwg.mxu0
    %1471 = vmatpush.bf16.msra.mxu0 %v1211
    %1472 = vmatpush.bf16.msra.mxu0 %v1207
    %1473 = vmatpush.bf16.msra.mxu0 %v1203
    %1474 = vmatpush.bf16.msra.mxu0 %v1199
    %1475 = vmatpush.bf16.msra.mxu0 %v1195
    %1476 = vmatpush.bf16.msra.mxu0 %v1191
    %1477 = vmatpush.bf16.msra.mxu0 %v1187
    %1478 = vmatpush.bf16.msra.mxu0 %v1183
    %1479 = vmatmul.bf16.gmra.mxu0 %v754
    %v1480 = vpop.f32.mrf.mxu0
    %v1481 = vadd.f32 %v1468, %v1480
    %v1482 = vpop.f32.mrf.mxu0
    %1483 = vdwg.mxu0
    %1484 = vmatpush.bf16.msra.mxu0 %v1243
    %1485 = vmatpush.bf16.msra.mxu0 %v1239
    %1486 = vmatpush.bf16.msra.mxu0 %v1235
    %1487 = vmatpush.bf16.msra.mxu0 %v1231
    %1488 = vmatpush.bf16.msra.mxu0 %v1227
    %1489 = vmatpush.bf16.msra.mxu0 %v1223
    %1490 = vmatpush.bf16.msra.mxu0 %v1219
    %1491 = vmatpush.bf16.msra.mxu0 %v1215
    %1492 = vmatmul.bf16.gmra.mxu0 %v755
    %v1493 = vpop.f32.mrf.mxu0
    %v1494 = vadd.f32 %v1481, %v1493
    %v1495 = vpop.f32.mrf.mxu0
    %1496 = vdwg.mxu0
    %1497 = vmatpush.bf16.msra.mxu0 %v1275
    %1498 = vmatpush.bf16.msra.mxu0 %v1271
    %1499 = vmatpush.bf16.msra.mxu0 %v1267
    %1500 = vmatpush.bf16.msra.mxu0 %v1263
    %1501 = vmatpush.bf16.msra.mxu0 %v1259
    %1502 = vmatpush.bf16.msra.mxu0 %v1255
    %1503 = vmatpush.bf16.msra.mxu0 %v1251
    %1504 = vmatpush.bf16.msra.mxu0 %v1247
    %1505 = vmatmul.bf16.gmra.mxu0 %v756
    %v1506 = vpop.f32.mrf.mxu0
    %v1507 = vadd.f32 %v1494, %v1506
    %v1508 = vpop.f32.mrf.mxu0
    %1509 = vdwg.mxu0
    %1510 = vmatpush.bf16.msra.mxu0 %v1180
    %1511 = vmatpush.bf16.msra.mxu0 %v1176
    %1512 = vmatpush.bf16.msra.mxu0 %v1172
    %1513 = vmatpush.bf16.msra.mxu0 %v1168
    %1514 = vmatpush.bf16.msra.mxu0 %v1164
    %1515 = vmatpush.bf16.msra.mxu0 %v1160
    %1516 = vmatpush.bf16.msra.mxu0 %v1156
    %1517 = vmatpush.bf16.msra.mxu0 %v1152
    %1518 = vmatmul.bf16.gmra.mxu0 %v753
    %v1519 = vpop.f32.mrf.mxu0
    %v1520 = vadd.f32 %v760, %v1519
    %v1521 = vpop.f32.mrf.mxu0
    %1522 = vdwg.mxu0
    %1523 = vmatpush.bf16.msra.mxu0 %v1212
    %1524 = vmatpush.bf16.msra.mxu0 %v1208
    %1525 = vmatpush.bf16.msra.mxu0 %v1204
    %1526 = vmatpush.bf16.msra.mxu0 %v1200
    %1527 = vmatpush.bf16.msra.mxu0 %v1196
    %1528 = vmatpush.bf16.msra.mxu0 %v1192
    %1529 = vmatpush.bf16.msra.mxu0 %v1188
    %1530 = vmatpush.bf16.msra.mxu0 %v1184
    %1531 = vmatmul.bf16.gmra.mxu0 %v754
    %v1532 = vpop.f32.mrf.mxu0
    %v1533 = vadd.f32 %v1520, %v1532
    %v1534 = vpop.f32.mrf.mxu0
    %1535 = vdwg.mxu0
    %1536 = vmatpush.bf16.msra.mxu0 %v1244
    %1537 = vmatpush.bf16.msra.mxu0 %v1240
    %1538 = vmatpush.bf16.msra.mxu0 %v1236
    %1539 = vmatpush.bf16.msra.mxu0 %v1232
    %1540 = vmatpush.bf16.msra.mxu0 %v1228
    %1541 = vmatpush.bf16.msra.mxu0 %v1224
    %1542 = vmatpush.bf16.msra.mxu0 %v1220
    %1543 = vmatpush.bf16.msra.mxu0 %v1216
    %1544 = vmatmul.bf16.gmra.mxu0 %v755
    %v1545 = vpop.f32.mrf.mxu0
    %v1546 = vadd.f32 %v1533, %v1545
    %v1547 = vpop.f32.mrf.mxu0
    %1548 = vdwg.mxu0
    %1549 = vmatpush.bf16.msra.mxu0 %v1276
    %1550 = vmatpush.bf16.msra.mxu0 %v1272
    %1551 = vmatpush.bf16.msra.mxu0 %v1268
    %1552 = vmatpush.bf16.msra.mxu0 %v1264
    %1553 = vmatpush.bf16.msra.mxu0 %v1260
    %1554 = vmatpush.bf16.msra.mxu0 %v1256
    %1555 = vmatpush.bf16.msra.mxu0 %v1252
    %1556 = vmatpush.bf16.msra.mxu0 %v1248
    %1557 = vmatmul.bf16.gmra.mxu0 %v756
    %v1558 = vpop.f32.mrf.mxu0
    %v1559 = vadd.f32 %v1546, %v1558
    %v1560 = vpop.f32.mrf.mxu0
    %1561 = vdwg.mxu0
    %1562 = vmatpush.bf16.msra.mxu0 %v1181
    %1563 = vmatpush.bf16.msra.mxu0 %v1177
    %1564 = vmatpush.bf16.msra.mxu0 %v1173
    %1565 = vmatpush.bf16.msra.mxu0 %v1169
    %1566 = vmatpush.bf16.msra.mxu0 %v1165
    %1567 = vmatpush.bf16.msra.mxu0 %v1161
    %1568 = vmatpush.bf16.msra.mxu0 %v1157
    %1569 = vmatpush.bf16.msra.mxu0 %v1153
    %1570 = vmatmul.bf16.gmra.mxu0 %v753
    %v1571 = vpop.f32.mrf.mxu0
    %v1572 = vadd.f32 %v761, %v1571
    %v1573 = vpop.f32.mrf.mxu0
    %1574 = vdwg.mxu0
    %1575 = vmatpush.bf16.msra.mxu0 %v1213
    %1576 = vmatpush.bf16.msra.mxu0 %v1209
    %1577 = vmatpush.bf16.msra.mxu0 %v1205
    %1578 = vmatpush.bf16.msra.mxu0 %v1201
    %1579 = vmatpush.bf16.msra.mxu0 %v1197
    %1580 = vmatpush.bf16.msra.mxu0 %v1193
    %1581 = vmatpush.bf16.msra.mxu0 %v1189
    %1582 = vmatpush.bf16.msra.mxu0 %v1185
    %1583 = vmatmul.bf16.gmra.mxu0 %v754
    %v1584 = vpop.f32.mrf.mxu0
    %v1585 = vadd.f32 %v1572, %v1584
    %v1586 = vpop.f32.mrf.mxu0
    %1587 = vdwg.mxu0
    %1588 = vmatpush.bf16.msra.mxu0 %v1245
    %1589 = vmatpush.bf16.msra.mxu0 %v1241
    %1590 = vmatpush.bf16.msra.mxu0 %v1237
    %1591 = vmatpush.bf16.msra.mxu0 %v1233
    %1592 = vmatpush.bf16.msra.mxu0 %v1229
    %1593 = vmatpush.bf16.msra.mxu0 %v1225
    %1594 = vmatpush.bf16.msra.mxu0 %v1221
    %1595 = vmatpush.bf16.msra.mxu0 %v1217
    %1596 = vmatmul.bf16.gmra.mxu0 %v755
    %v1597 = vpop.f32.mrf.mxu0
    %v1598 = vadd.f32 %v1585, %v1597
    %v1599 = vpop.f32.mrf.mxu0
    %1600 = vdwg.mxu0
    %1601 = vmatpush.bf16.msra.mxu0 %v1277
    %1602 = vmatpush.bf16.msra.mxu0 %v1273
    %1603 = vmatpush.bf16.msra.mxu0 %v1269
    %1604 = vmatpush.bf16.msra.mxu0 %v1265
    %1605 = vmatpush.bf16.msra.mxu0 %v1261
    %1606 = vmatpush.bf16.msra.mxu0 %v1257
    %1607 = vmatpush.bf16.msra.mxu0 %v1253
    %1608 = vmatpush.bf16.msra.mxu0 %v1249
    %1609 = vmatmul.bf16.gmra.mxu0 %v756
    %v1610 = vpop.f32.mrf.mxu0
    %v1611 = vadd.f32 %v1598, %v1610
    %v1612 = vpop.f32.mrf.mxu0
    %1613 = vdwg.mxu0
    %v1614 = vmul.f32 %v1455, 0.5
    %v1615 = vmul.f32 %v1507, 0.5
    %v1616 = vmul.f32 %v1559, 0.5
    %v1617 = vmul.f32 %v1611, 0.5
    %v1618 = vtanh.pop %v1614
    %v1619 = vtanh.pop %v1615
    %v1620 = vtanh.pop %v1616
    %v1621 = vtanh.pop %v1617
    %v1622 = vmul.f32 %v1618, 0.5
    %v1623 = vmul.f32 %v1619, 0.5
    %v1624 = vmul.f32 %v1620, 0.5
    %v1625 = vmul.f32 %v1621, 0.5
    %v1626 = vadd.f32 %v1622, 0.5
    %v1627 = vadd.f32 %v1623, 0.5
    %v1628 = vadd.f32 %v1624, 0.5
    %v1629 = vadd.f32 %v1625, 0.5
    %v1630 = vpack.c.bf16 %v1626, %v1626
    %v1631 = vpack.c.bf16 %v1627, %v1627
    %v1632 = vpack.c.bf16 %v1628, %v1628
    %v1633 = vpack.c.bf16 %v1629, %v1629
    %v1635 = vperm.slane %v445, 0
    %v1636 = vperm.slane %v445, 1
    %v1637 = vperm.slane %v445, 2
    %v1638 = vperm.slane %v445, 3
    %v1771 = vunpack.c.l.b16 %v317
    %v1772 = vunpack.c.h.b16 %v317
    %v1773 = vunpack.c.l.b16 %v318
    %v1774 = vunpack.c.h.b16 %v318
    %v1775 = vunpack.c.l.b16 %v319
    %v1776 = vunpack.c.h.b16 %v319
    %v1777 = vunpack.c.l.b16 %v320
    %v1778 = vunpack.c.h.b16 %v320
    %v1779 = vunpack.c.l.b16 %v321
    %v1780 = vunpack.c.h.b16 %v321
    %v1781 = vunpack.c.l.b16 %v322
    %v1782 = vunpack.c.h.b16 %v322
    %v1783 = vunpack.c.l.b16 %v323
    %v1784 = vunpack.c.h.b16 %v323
    %v1785 = vunpack.c.l.b16 %v324
    %v1786 = vunpack.c.h.b16 %v324
    %v1787 = vunpack.c.l.b16 %v325
    %v1788 = vunpack.c.h.b16 %v325
    %v1789 = vunpack.c.l.b16 %v326
    %v1790 = vunpack.c.h.b16 %v326
    %v1791 = vunpack.c.l.b16 %v327
    %v1792 = vunpack.c.h.b16 %v327
    %v1793 = vunpack.c.l.b16 %v328
    %v1794 = vunpack.c.h.b16 %v328
    %v1795 = vunpack.c.l.b16 %v329
    %v1796 = vunpack.c.h.b16 %v329
    %v1797 = vunpack.c.l.b16 %v330
    %v1798 = vunpack.c.h.b16 %v330
    %v1799 = vunpack.c.l.b16 %v331
    %v1800 = vunpack.c.h.b16 %v331
    %v1801 = vunpack.c.l.b16 %v332
    %v1802 = vunpack.c.h.b16 %v332
    %v1803 = vunpack.c.l.b16 %v333
    %v1804 = vunpack.c.h.b16 %v333
    %v1805 = vunpack.c.l.b16 %v334
    %v1806 = vunpack.c.h.b16 %v334
    %v1807 = vunpack.c.l.b16 %v335
    %v1808 = vunpack.c.h.b16 %v335
    %v1809 = vunpack.c.l.b16 %v336
    %v1810 = vunpack.c.h.b16 %v336
    %v1811 = vunpack.c.l.b16 %v337
    %v1812 = vunpack.c.h.b16 %v337
    %v1813 = vunpack.c.l.b16 %v338
    %v1814 = vunpack.c.h.b16 %v338
    %v1815 = vunpack.c.l.b16 %v339
    %v1816 = vunpack.c.h.b16 %v339
    %v1817 = vunpack.c.l.b16 %v340
    %v1818 = vunpack.c.h.b16 %v340
    %v1819 = vunpack.c.l.b16 %v341
    %v1820 = vunpack.c.h.b16 %v341
    %v1821 = vunpack.c.l.b16 %v342
    %v1822 = vunpack.c.h.b16 %v342
    %v1823 = vunpack.c.l.b16 %v343
    %v1824 = vunpack.c.h.b16 %v343
    %v1825 = vunpack.c.l.b16 %v344
    %v1826 = vunpack.c.h.b16 %v344
    %v1827 = vunpack.c.l.b16 %v345
    %v1828 = vunpack.c.h.b16 %v345
    %v1829 = vunpack.c.l.b16 %v346
    %v1830 = vunpack.c.h.b16 %v346
    %v1831 = vunpack.c.l.b16 %v347
    %v1832 = vunpack.c.h.b16 %v347
    %v1833 = vunpack.c.l.b16 %v348
    %v1834 = vunpack.c.h.b16 %v348
    %v1835 = vunpack.c.l.b16 %v349
    %v1836 = vunpack.c.h.b16 %v349
    %v1837 = vunpack.c.l.b16 %v350
    %v1838 = vunpack.c.h.b16 %v350
    %v1839 = vunpack.c.l.b16 %v351
    %v1840 = vunpack.c.h.b16 %v351
    %v1841 = vunpack.c.l.b16 %v352
    %v1842 = vunpack.c.h.b16 %v352
    %v1843 = vunpack.c.l.b16 %v353
    %v1844 = vunpack.c.h.b16 %v353
    %v1845 = vunpack.c.l.b16 %v354
    %v1846 = vunpack.c.h.b16 %v354
    %v1847 = vunpack.c.l.b16 %v355
    %v1848 = vunpack.c.h.b16 %v355
    %v1849 = vunpack.c.l.b16 %v356
    %v1850 = vunpack.c.h.b16 %v356
    %v1851 = vunpack.c.l.b16 %v357
    %v1852 = vunpack.c.h.b16 %v357
    %v1853 = vunpack.c.l.b16 %v358
    %v1854 = vunpack.c.h.b16 %v358
    %v1855 = vunpack.c.l.b16 %v359
    %v1856 = vunpack.c.h.b16 %v359
    %v1857 = vunpack.c.l.b16 %v360
    %v1858 = vunpack.c.h.b16 %v360
    %v1859 = vunpack.c.l.b16 %v361
    %v1860 = vunpack.c.h.b16 %v361
    %v1861 = vunpack.c.l.b16 %v362
    %v1862 = vunpack.c.h.b16 %v362
    %v1863 = vunpack.c.l.b16 %v363
    %v1864 = vunpack.c.h.b16 %v363
    %v1865 = vunpack.c.l.b16 %v364
    %v1866 = vunpack.c.h.b16 %v364
    %v1867 = vunpack.c.l.b16 %v365
    %v1868 = vunpack.c.h.b16 %v365
    %v1869 = vunpack.c.l.b16 %v366
    %v1870 = vunpack.c.h.b16 %v366
    %v1871 = vunpack.c.l.b16 %v367
    %v1872 = vunpack.c.h.b16 %v367
    %v1873 = vunpack.c.l.b16 %v368
    %v1874 = vunpack.c.h.b16 %v368
    %v1875 = vunpack.c.l.b16 %v369
    %v1876 = vunpack.c.h.b16 %v369
    %v1877 = vunpack.c.l.b16 %v370
    %v1878 = vunpack.c.h.b16 %v370
    %v1879 = vunpack.c.l.b16 %v371
    %v1880 = vunpack.c.h.b16 %v371
    %v1881 = vunpack.c.l.b16 %v372
    %v1882 = vunpack.c.h.b16 %v372
    %v1883 = vunpack.c.l.b16 %v373
    %v1884 = vunpack.c.h.b16 %v373
    %v1885 = vunpack.c.l.b16 %v374
    %v1886 = vunpack.c.h.b16 %v374
    %v1887 = vunpack.c.l.b16 %v375
    %v1888 = vunpack.c.h.b16 %v375
    %v1889 = vunpack.c.l.b16 %v376
    %v1890 = vunpack.c.h.b16 %v376
    %v1891 = vunpack.c.l.b16 %v377
    %v1892 = vunpack.c.h.b16 %v377
    %v1893 = vunpack.c.l.b16 %v378
    %v1894 = vunpack.c.h.b16 %v378
    %v1895 = vunpack.c.l.b16 %v379
    %v1896 = vunpack.c.h.b16 %v379
    %v1897 = vunpack.c.l.b16 %v380
    %v1898 = vunpack.c.h.b16 %v380
    %v1899 = vunpack.c.l.b16 %v381
    %v1900 = vunpack.c.h.b16 %v381
    %v1901 = vunpack.c.l.b16 %v382
    %v1902 = vunpack.c.h.b16 %v382
    %v1903 = vunpack.c.l.b16 %v383
    %v1904 = vunpack.c.h.b16 %v383
    %v1905 = vunpack.c.l.b16 %v384
    %v1906 = vunpack.c.h.b16 %v384
    %v1907 = vunpack.c.l.b16 %v385
    %v1908 = vunpack.c.h.b16 %v385
    %v1909 = vunpack.c.l.b16 %v386
    %v1910 = vunpack.c.h.b16 %v386
    %v1911 = vunpack.c.l.b16 %v387
    %v1912 = vunpack.c.h.b16 %v387
    %v1913 = vunpack.c.l.b16 %v388
    %v1914 = vunpack.c.h.b16 %v388
    %v1915 = vunpack.c.l.b16 %v389
    %v1916 = vunpack.c.h.b16 %v389
    %v1917 = vunpack.c.l.b16 %v390
    %v1918 = vunpack.c.h.b16 %v390
    %v1919 = vunpack.c.l.b16 %v391
    %v1920 = vunpack.c.h.b16 %v391
    %v1921 = vunpack.c.l.b16 %v392
    %v1922 = vunpack.c.h.b16 %v392
    %v1923 = vunpack.c.l.b16 %v393
    %v1924 = vunpack.c.h.b16 %v393
    %v1925 = vunpack.c.l.b16 %v394
    %v1926 = vunpack.c.h.b16 %v394
    %v1927 = vunpack.c.l.b16 %v395
    %v1928 = vunpack.c.h.b16 %v395
    %v1929 = vunpack.c.l.b16 %v396
    %v1930 = vunpack.c.h.b16 %v396
    %v1931 = vunpack.c.l.b16 %v397
    %v1932 = vunpack.c.h.b16 %v397
    %v1933 = vunpack.c.l.b16 %v398
    %v1934 = vunpack.c.h.b16 %v398
    %v1935 = vunpack.c.l.b16 %v399
    %v1936 = vunpack.c.h.b16 %v399
    %v1937 = vunpack.c.l.b16 %v400
    %v1938 = vunpack.c.h.b16 %v400
    %v1939 = vunpack.c.l.b16 %v401
    %v1940 = vunpack.c.h.b16 %v401
    %v1941 = vunpack.c.l.b16 %v402
    %v1942 = vunpack.c.h.b16 %v402
    %v1943 = vunpack.c.l.b16 %v403
    %v1944 = vunpack.c.h.b16 %v403
    %v1945 = vunpack.c.l.b16 %v404
    %v1946 = vunpack.c.h.b16 %v404
    %v1947 = vunpack.c.l.b16 %v405
    %v1948 = vunpack.c.h.b16 %v405
    %v1949 = vunpack.c.l.b16 %v406
    %v1950 = vunpack.c.h.b16 %v406
    %v1951 = vunpack.c.l.b16 %v407
    %v1952 = vunpack.c.h.b16 %v407
    %v1953 = vunpack.c.l.b16 %v408
    %v1954 = vunpack.c.h.b16 %v408
    %v1955 = vunpack.c.l.b16 %v409
    %v1956 = vunpack.c.h.b16 %v409
    %v1957 = vunpack.c.l.b16 %v410
    %v1958 = vunpack.c.h.b16 %v410
    %v1959 = vunpack.c.l.b16 %v411
    %v1960 = vunpack.c.h.b16 %v411
    %v1961 = vunpack.c.l.b16 %v412
    %v1962 = vunpack.c.h.b16 %v412
    %v1963 = vunpack.c.l.b16 %v413
    %v1964 = vunpack.c.h.b16 %v413
    %v1965 = vunpack.c.l.b16 %v414
    %v1966 = vunpack.c.h.b16 %v414
    %v1967 = vunpack.c.l.b16 %v415
    %v1968 = vunpack.c.h.b16 %v415
    %v1969 = vunpack.c.l.b16 %v416
    %v1970 = vunpack.c.h.b16 %v416
    %v1971 = vunpack.c.l.b16 %v417
    %v1972 = vunpack.c.h.b16 %v417
    %v1973 = vunpack.c.l.b16 %v418
    %v1974 = vunpack.c.h.b16 %v418
    %v1975 = vunpack.c.l.b16 %v419
    %v1976 = vunpack.c.h.b16 %v419
    %v1977 = vunpack.c.l.b16 %v420
    %v1978 = vunpack.c.h.b16 %v420
    %v1979 = vunpack.c.l.b16 %v421
    %v1980 = vunpack.c.h.b16 %v421
    %v1981 = vunpack.c.l.b16 %v422
    %v1982 = vunpack.c.h.b16 %v422
    %v1983 = vunpack.c.l.b16 %v423
    %v1984 = vunpack.c.h.b16 %v423
    %v1985 = vunpack.c.l.b16 %v424
    %v1986 = vunpack.c.h.b16 %v424
    %v1987 = vunpack.c.l.b16 %v425
    %v1988 = vunpack.c.h.b16 %v425
    %v1989 = vunpack.c.l.b16 %v426
    %v1990 = vunpack.c.h.b16 %v426
    %v1991 = vunpack.c.l.b16 %v427
    %v1992 = vunpack.c.h.b16 %v427
    %v1993 = vunpack.c.l.b16 %v428
    %v1994 = vunpack.c.h.b16 %v428
    %v1995 = vunpack.c.l.b16 %v429
    %v1996 = vunpack.c.h.b16 %v429
    %v1997 = vunpack.c.l.b16 %v430
    %v1998 = vunpack.c.h.b16 %v430
    %v1999 = vunpack.c.l.b16 %v431
    %v2000 = vunpack.c.h.b16 %v431
    %v2001 = vunpack.c.l.b16 %v432
    %v2002 = vunpack.c.h.b16 %v432
    %v2003 = vunpack.c.l.b16 %v433
    %v2004 = vunpack.c.h.b16 %v433
    %v2005 = vunpack.c.l.b16 %v434
    %v2006 = vunpack.c.h.b16 %v434
    %v2007 = vunpack.c.l.b16 %v435
    %v2008 = vunpack.c.h.b16 %v435
    %v2009 = vunpack.c.l.b16 %v436
    %v2010 = vunpack.c.h.b16 %v436
    %v2011 = vunpack.c.l.b16 %v437
    %v2012 = vunpack.c.h.b16 %v437
    %v2013 = vunpack.c.l.b16 %v438
    %v2014 = vunpack.c.h.b16 %v438
    %v2015 = vunpack.c.l.b16 %v439
    %v2016 = vunpack.c.h.b16 %v439
    %v2017 = vunpack.c.l.b16 %v440
    %v2018 = vunpack.c.h.b16 %v440
    %v2019 = vunpack.c.l.b16 %v441
    %v2020 = vunpack.c.h.b16 %v441
    %v2021 = vunpack.c.l.b16 %v442
    %v2022 = vunpack.c.h.b16 %v442
    %v2023 = vunpack.c.l.b16 %v443
    %v2024 = vunpack.c.h.b16 %v443
    %v2025 = vunpack.c.l.b16 %v444
    %v2026 = vunpack.c.h.b16 %v444
    %v2027 = vpack.c.b16 %v1775, %v1771
    %v2028 = vpack.c.b16 %v1776, %v1772
    %v2029 = vpack.c.b16 %v1777, %v1773
    %v2030 = vpack.c.b16 %v1778, %v1774
    %v2031 = vpack.c.b16 %v1783, %v1779
    %v2032 = vpack.c.b16 %v1784, %v1780
    %v2033 = vpack.c.b16 %v1785, %v1781
    %v2034 = vpack.c.b16 %v1786, %v1782
    %v2035 = vpack.c.b16 %v1791, %v1787
    %v2036 = vpack.c.b16 %v1792, %v1788
    %v2037 = vpack.c.b16 %v1793, %v1789
    %v2038 = vpack.c.b16 %v1794, %v1790
    %v2039 = vpack.c.b16 %v1799, %v1795
    %v2040 = vpack.c.b16 %v1800, %v1796
    %v2041 = vpack.c.b16 %v1801, %v1797
    %v2042 = vpack.c.b16 %v1802, %v1798
    %v2043 = vpack.c.b16 %v1807, %v1803
    %v2044 = vpack.c.b16 %v1808, %v1804
    %v2045 = vpack.c.b16 %v1809, %v1805
    %v2046 = vpack.c.b16 %v1810, %v1806
    %v2047 = vpack.c.b16 %v1815, %v1811
    %v2048 = vpack.c.b16 %v1816, %v1812
    %v2049 = vpack.c.b16 %v1817, %v1813
    %v2050 = vpack.c.b16 %v1818, %v1814
    %v2051 = vpack.c.b16 %v1823, %v1819
    %v2052 = vpack.c.b16 %v1824, %v1820
    %v2053 = vpack.c.b16 %v1825, %v1821
    %v2054 = vpack.c.b16 %v1826, %v1822
    %v2055 = vpack.c.b16 %v1831, %v1827
    %v2056 = vpack.c.b16 %v1832, %v1828
    %v2057 = vpack.c.b16 %v1833, %v1829
    %v2058 = vpack.c.b16 %v1834, %v1830
    %v2059 = vpack.c.b16 %v1839, %v1835
    %v2060 = vpack.c.b16 %v1840, %v1836
    %v2061 = vpack.c.b16 %v1841, %v1837
    %v2062 = vpack.c.b16 %v1842, %v1838
    %v2063 = vpack.c.b16 %v1847, %v1843
    %v2064 = vpack.c.b16 %v1848, %v1844
    %v2065 = vpack.c.b16 %v1849, %v1845
    %v2066 = vpack.c.b16 %v1850, %v1846
    %v2067 = vpack.c.b16 %v1855, %v1851
    %v2068 = vpack.c.b16 %v1856, %v1852
    %v2069 = vpack.c.b16 %v1857, %v1853
    %v2070 = vpack.c.b16 %v1858, %v1854
    %v2071 = vpack.c.b16 %v1863, %v1859
    %v2072 = vpack.c.b16 %v1864, %v1860
    %v2073 = vpack.c.b16 %v1865, %v1861
    %v2074 = vpack.c.b16 %v1866, %v1862
    %v2075 = vpack.c.b16 %v1871, %v1867
    %v2076 = vpack.c.b16 %v1872, %v1868
    %v2077 = vpack.c.b16 %v1873, %v1869
    %v2078 = vpack.c.b16 %v1874, %v1870
    %v2079 = vpack.c.b16 %v1879, %v1875
    %v2080 = vpack.c.b16 %v1880, %v1876
    %v2081 = vpack.c.b16 %v1881, %v1877
    %v2082 = vpack.c.b16 %v1882, %v1878
    %v2083 = vpack.c.b16 %v1887, %v1883
    %v2084 = vpack.c.b16 %v1888, %v1884
    %v2085 = vpack.c.b16 %v1889, %v1885
    %v2086 = vpack.c.b16 %v1890, %v1886
    %v2087 = vpack.c.b16 %v1895, %v1891
    %v2088 = vpack.c.b16 %v1896, %v1892
    %v2089 = vpack.c.b16 %v1897, %v1893
    %v2090 = vpack.c.b16 %v1898, %v1894
    %v2091 = vpack.c.b16 %v1903, %v1899
    %v2092 = vpack.c.b16 %v1904, %v1900
    %v2093 = vpack.c.b16 %v1905, %v1901
    %v2094 = vpack.c.b16 %v1906, %v1902
    %v2095 = vpack.c.b16 %v1911, %v1907
    %v2096 = vpack.c.b16 %v1912, %v1908
    %v2097 = vpack.c.b16 %v1913, %v1909
    %v2098 = vpack.c.b16 %v1914, %v1910
    %v2099 = vpack.c.b16 %v1919, %v1915
    %v2100 = vpack.c.b16 %v1920, %v1916
    %v2101 = vpack.c.b16 %v1921, %v1917
    %v2102 = vpack.c.b16 %v1922, %v1918
    %v2103 = vpack.c.b16 %v1927, %v1923
    %v2104 = vpack.c.b16 %v1928, %v1924
    %v2105 = vpack.c.b16 %v1929, %v1925
    %v2106 = vpack.c.b16 %v1930, %v1926
    %v2107 = vpack.c.b16 %v1935, %v1931
    %v2108 = vpack.c.b16 %v1936, %v1932
    %v2109 = vpack.c.b16 %v1937, %v1933
    %v2110 = vpack.c.b16 %v1938, %v1934
    %v2111 = vpack.c.b16 %v1943, %v1939
    %v2112 = vpack.c.b16 %v1944, %v1940
    %v2113 = vpack.c.b16 %v1945, %v1941
    %v2114 = vpack.c.b16 %v1946, %v1942
    %v2115 = vpack.c.b16 %v1951, %v1947
    %v2116 = vpack.c.b16 %v1952, %v1948
    %v2117 = vpack.c.b16 %v1953, %v1949
    %v2118 = vpack.c.b16 %v1954, %v1950
    %v2119 = vpack.c.b16 %v1959, %v1955
    %v2120 = vpack.c.b16 %v1960, %v1956
    %v2121 = vpack.c.b16 %v1961, %v1957
    %v2122 = vpack.c.b16 %v1962, %v1958
    %v2123 = vpack.c.b16 %v1967, %v1963
    %v2124 = vpack.c.b16 %v1968, %v1964
    %v2125 = vpack.c.b16 %v1969, %v1965
    %v2126 = vpack.c.b16 %v1970, %v1966
    %v2127 = vpack.c.b16 %v1975, %v1971
    %v2128 = vpack.c.b16 %v1976, %v1972
    %v2129 = vpack.c.b16 %v1977, %v1973
    %v2130 = vpack.c.b16 %v1978, %v1974
    %v2131 = vpack.c.b16 %v1983, %v1979
    %v2132 = vpack.c.b16 %v1984, %v1980
    %v2133 = vpack.c.b16 %v1985, %v1981
    %v2134 = vpack.c.b16 %v1986, %v1982
    %v2135 = vpack.c.b16 %v1991, %v1987
    %v2136 = vpack.c.b16 %v1992, %v1988
    %v2137 = vpack.c.b16 %v1993, %v1989
    %v2138 = vpack.c.b16 %v1994, %v1990
    %v2139 = vpack.c.b16 %v1999, %v1995
    %v2140 = vpack.c.b16 %v2000, %v1996
    %v2141 = vpack.c.b16 %v2001, %v1997
    %v2142 = vpack.c.b16 %v2002, %v1998
    %v2143 = vpack.c.b16 %v2007, %v2003
    %v2144 = vpack.c.b16 %v2008, %v2004
    %v2145 = vpack.c.b16 %v2009, %v2005
    %v2146 = vpack.c.b16 %v2010, %v2006
    %v2147 = vpack.c.b16 %v2015, %v2011
    %v2148 = vpack.c.b16 %v2016, %v2012
    %v2149 = vpack.c.b16 %v2017, %v2013
    %v2150 = vpack.c.b16 %v2018, %v2014
    %v2151 = vpack.c.b16 %v2023, %v2019
    %v2152 = vpack.c.b16 %v2024, %v2020
    %v2153 = vpack.c.b16 %v2025, %v2021
    %v2154 = vpack.c.b16 %v2026, %v2022
    %2283 = vmatpush.bf16.msra.mxu0 %v2055
    %2284 = vmatpush.bf16.msra.mxu0 %v2051
    %2285 = vmatpush.bf16.msra.mxu0 %v2047
    %2286 = vmatpush.bf16.msra.mxu0 %v2043
    %2287 = vmatpush.bf16.msra.mxu0 %v2039
    %2288 = vmatpush.bf16.msra.mxu0 %v2035
    %2289 = vmatpush.bf16.msra.mxu0 %v2031
    %2290 = vmatpush.bf16.msra.mxu0 %v2027
    %2291 = vmatmul.bf16.gmra.mxu0 %v1630
    %v2292 = vpop.f32.mrf.mxu0
    %v2293 = vadd.f32 %v1635, %v2292
    %v2294 = vpop.f32.mrf.mxu0
    %2295 = vdwg.mxu0
    %2296 = vmatpush.bf16.msra.mxu0 %v2087
    %2297 = vmatpush.bf16.msra.mxu0 %v2083
    %2298 = vmatpush.bf16.msra.mxu0 %v2079
    %2299 = vmatpush.bf16.msra.mxu0 %v2075
    %2300 = vmatpush.bf16.msra.mxu0 %v2071
    %2301 = vmatpush.bf16.msra.mxu0 %v2067
    %2302 = vmatpush.bf16.msra.mxu0 %v2063
    %2303 = vmatpush.bf16.msra.mxu0 %v2059
    %2304 = vmatmul.bf16.gmra.mxu0 %v1631
    %v2305 = vpop.f32.mrf.mxu0
    %v2306 = vadd.f32 %v2293, %v2305
    %v2307 = vpop.f32.mrf.mxu0
    %2308 = vdwg.mxu0
    %2309 = vmatpush.bf16.msra.mxu0 %v2119
    %2310 = vmatpush.bf16.msra.mxu0 %v2115
    %2311 = vmatpush.bf16.msra.mxu0 %v2111
    %2312 = vmatpush.bf16.msra.mxu0 %v2107
    %2313 = vmatpush.bf16.msra.mxu0 %v2103
    %2314 = vmatpush.bf16.msra.mxu0 %v2099
    %2315 = vmatpush.bf16.msra.mxu0 %v2095
    %2316 = vmatpush.bf16.msra.mxu0 %v2091
    %2317 = vmatmul.bf16.gmra.mxu0 %v1632
    %v2318 = vpop.f32.mrf.mxu0
    %v2319 = vadd.f32 %v2306, %v2318
    %v2320 = vpop.f32.mrf.mxu0
    %2321 = vdwg.mxu0
    %2322 = vmatpush.bf16.msra.mxu0 %v2151
    %2323 = vmatpush.bf16.msra.mxu0 %v2147
    %2324 = vmatpush.bf16.msra.mxu0 %v2143
    %2325 = vmatpush.bf16.msra.mxu0 %v2139
    %2326 = vmatpush.bf16.msra.mxu0 %v2135
    %2327 = vmatpush.bf16.msra.mxu0 %v2131
    %2328 = vmatpush.bf16.msra.mxu0 %v2127
    %2329 = vmatpush.bf16.msra.mxu0 %v2123
    %2330 = vmatmul.bf16.gmra.mxu0 %v1633
    %v2331 = vpop.f32.mrf.mxu0
    %v2332 = vadd.f32 %v2319, %v2331
    %v2333 = vpop.f32.mrf.mxu0
    %2334 = vdwg.mxu0
    %2335 = vmatpush.bf16.msra.mxu0 %v2056
    %2336 = vmatpush.bf16.msra.mxu0 %v2052
    %2337 = vmatpush.bf16.msra.mxu0 %v2048
    %2338 = vmatpush.bf16.msra.mxu0 %v2044
    %2339 = vmatpush.bf16.msra.mxu0 %v2040
    %2340 = vmatpush.bf16.msra.mxu0 %v2036
    %2341 = vmatpush.bf16.msra.mxu0 %v2032
    %2342 = vmatpush.bf16.msra.mxu0 %v2028
    %2343 = vmatmul.bf16.gmra.mxu0 %v1630
    %v2344 = vpop.f32.mrf.mxu0
    %v2345 = vadd.f32 %v1636, %v2344
    %v2346 = vpop.f32.mrf.mxu0
    %2347 = vdwg.mxu0
    %2348 = vmatpush.bf16.msra.mxu0 %v2088
    %2349 = vmatpush.bf16.msra.mxu0 %v2084
    %2350 = vmatpush.bf16.msra.mxu0 %v2080
    %2351 = vmatpush.bf16.msra.mxu0 %v2076
    %2352 = vmatpush.bf16.msra.mxu0 %v2072
    %2353 = vmatpush.bf16.msra.mxu0 %v2068
    %2354 = vmatpush.bf16.msra.mxu0 %v2064
    %2355 = vmatpush.bf16.msra.mxu0 %v2060
    %2356 = vmatmul.bf16.gmra.mxu0 %v1631
    %v2357 = vpop.f32.mrf.mxu0
    %v2358 = vadd.f32 %v2345, %v2357
    %v2359 = vpop.f32.mrf.mxu0
    %2360 = vdwg.mxu0
    %2361 = vmatpush.bf16.msra.mxu0 %v2120
    %2362 = vmatpush.bf16.msra.mxu0 %v2116
    %2363 = vmatpush.bf16.msra.mxu0 %v2112
    %2364 = vmatpush.bf16.msra.mxu0 %v2108
    %2365 = vmatpush.bf16.msra.mxu0 %v2104
    %2366 = vmatpush.bf16.msra.mxu0 %v2100
    %2367 = vmatpush.bf16.msra.mxu0 %v2096
    %2368 = vmatpush.bf16.msra.mxu0 %v2092
    %2369 = vmatmul.bf16.gmra.mxu0 %v1632
    %v2370 = vpop.f32.mrf.mxu0
    %v2371 = vadd.f32 %v2358, %v2370
    %v2372 = vpop.f32.mrf.mxu0
    %2373 = vdwg.mxu0
    %2374 = vmatpush.bf16.msra.mxu0 %v2152
    %2375 = vmatpush.bf16.msra.mxu0 %v2148
    %2376 = vmatpush.bf16.msra.mxu0 %v2144
    %2377 = vmatpush.bf16.msra.mxu0 %v2140
    %2378 = vmatpush.bf16.msra.mxu0 %v2136
    %2379 = vmatpush.bf16.msra.mxu0 %v2132
    %2380 = vmatpush.bf16.msra.mxu0 %v2128
    %2381 = vmatpush.bf16.msra.mxu0 %v2124
    %2382 = vmatmul.bf16.gmra.mxu0 %v1633
    %v2383 = vpop.f32.mrf.mxu0
    %v2384 = vadd.f32 %v2371, %v2383
    %v2385 = vpop.f32.mrf.mxu0
    %2386 = vdwg.mxu0
    %2387 = vmatpush.bf16.msra.mxu0 %v2057
    %2388 = vmatpush.bf16.msra.mxu0 %v2053
    %2389 = vmatpush.bf16.msra.mxu0 %v2049
    %2390 = vmatpush.bf16.msra.mxu0 %v2045
    %2391 = vmatpush.bf16.msra.mxu0 %v2041
    %2392 = vmatpush.bf16.msra.mxu0 %v2037
    %2393 = vmatpush.bf16.msra.mxu0 %v2033
    %2394 = vmatpush.bf16.msra.mxu0 %v2029
    %2395 = vmatmul.bf16.gmra.mxu0 %v1630
    %v2396 = vpop.f32.mrf.mxu0
    %v2397 = vadd.f32 %v1637, %v2396
    %v2398 = vpop.f32.mrf.mxu0
    %2399 = vdwg.mxu0
    %2400 = vmatpush.bf16.msra.mxu0 %v2089
    %2401 = vmatpush.bf16.msra.mxu0 %v2085
    %2402 = vmatpush.bf16.msra.mxu0 %v2081
    %2403 = vmatpush.bf16.msra.mxu0 %v2077
    %2404 = vmatpush.bf16.msra.mxu0 %v2073
    %2405 = vmatpush.bf16.msra.mxu0 %v2069
    %2406 = vmatpush.bf16.msra.mxu0 %v2065
    %2407 = vmatpush.bf16.msra.mxu0 %v2061
    %2408 = vmatmul.bf16.gmra.mxu0 %v1631
    %v2409 = vpop.f32.mrf.mxu0
    %v2410 = vadd.f32 %v2397, %v2409
    %v2411 = vpop.f32.mrf.mxu0
    %2412 = vdwg.mxu0
    %2413 = vmatpush.bf16.msra.mxu0 %v2121
    %2414 = vmatpush.bf16.msra.mxu0 %v2117
    %2415 = vmatpush.bf16.msra.mxu0 %v2113
    %2416 = vmatpush.bf16.msra.mxu0 %v2109
    %2417 = vmatpush.bf16.msra.mxu0 %v2105
    %2418 = vmatpush.bf16.msra.mxu0 %v2101
    %2419 = vmatpush.bf16.msra.mxu0 %v2097
    %2420 = vmatpush.bf16.msra.mxu0 %v2093
    %2421 = vmatmul.bf16.gmra.mxu0 %v1632
    %v2422 = vpop.f32.mrf.mxu0
    %v2423 = vadd.f32 %v2410, %v2422
    %v2424 = vpop.f32.mrf.mxu0
    %2425 = vdwg.mxu0
    %2426 = vmatpush.bf16.msra.mxu0 %v2153
    %2427 = vmatpush.bf16.msra.mxu0 %v2149
    %2428 = vmatpush.bf16.msra.mxu0 %v2145
    %2429 = vmatpush.bf16.msra.mxu0 %v2141
    %2430 = vmatpush.bf16.msra.mxu0 %v2137
    %2431 = vmatpush.bf16.msra.mxu0 %v2133
    %2432 = vmatpush.bf16.msra.mxu0 %v2129
    %2433 = vmatpush.bf16.msra.mxu0 %v2125
    %2434 = vmatmul.bf16.gmra.mxu0 %v1633
    %v2435 = vpop.f32.mrf.mxu0
    %v2436 = vadd.f32 %v2423, %v2435
    %v2437 = vpop.f32.mrf.mxu0
    %2438 = vdwg.mxu0
    %2439 = vmatpush.bf16.msra.mxu0 %v2058
    %2440 = vmatpush.bf16.msra.mxu0 %v2054
    %2441 = vmatpush.bf16.msra.mxu0 %v2050
    %2442 = vmatpush.bf16.msra.mxu0 %v2046
    %2443 = vmatpush.bf16.msra.mxu0 %v2042
    %2444 = vmatpush.bf16.msra.mxu0 %v2038
    %2445 = vmatpush.bf16.msra.mxu0 %v2034
    %2446 = vmatpush.bf16.msra.mxu0 %v2030
    %2447 = vmatmul.bf16.gmra.mxu0 %v1630
    %v2448 = vpop.f32.mrf.mxu0
    %v2449 = vadd.f32 %v1638, %v2448
    %v2450 = vpop.f32.mrf.mxu0
    %2451 = vdwg.mxu0
    %2452 = vmatpush.bf16.msra.mxu0 %v2090
    %2453 = vmatpush.bf16.msra.mxu0 %v2086
    %2454 = vmatpush.bf16.msra.mxu0 %v2082
    %2455 = vmatpush.bf16.msra.mxu0 %v2078
    %2456 = vmatpush.bf16.msra.mxu0 %v2074
    %2457 = vmatpush.bf16.msra.mxu0 %v2070
    %2458 = vmatpush.bf16.msra.mxu0 %v2066
    %2459 = vmatpush.bf16.msra.mxu0 %v2062
    %2460 = vmatmul.bf16.gmra.mxu0 %v1631
    %v2461 = vpop.f32.mrf.mxu0
    %v2462 = vadd.f32 %v2449, %v2461
    %v2463 = vpop.f32.mrf.mxu0
    %2464 = vdwg.mxu0
    %2465 = vmatpush.bf16.msra.mxu0 %v2122
    %2466 = vmatpush.bf16.msra.mxu0 %v2118
    %2467 = vmatpush.bf16.msra.mxu0 %v2114
    %2468 = vmatpush.bf16.msra.mxu0 %v2110
    %2469 = vmatpush.bf16.msra.mxu0 %v2106
    %2470 = vmatpush.bf16.msra.mxu0 %v2102
    %2471 = vmatpush.bf16.msra.mxu0 %v2098
    %2472 = vmatpush.bf16.msra.mxu0 %v2094
    %2473 = vmatmul.bf16.gmra.mxu0 %v1632
    %v2474 = vpop.f32.mrf.mxu0
    %v2475 = vadd.f32 %v2462, %v2474
    %v2476 = vpop.f32.mrf.mxu0
    %2477 = vdwg.mxu0
    %2478 = vmatpush.bf16.msra.mxu0 %v2154
    %2479 = vmatpush.bf16.msra.mxu0 %v2150
    %2480 = vmatpush.bf16.msra.mxu0 %v2146
    %2481 = vmatpush.bf16.msra.mxu0 %v2142
    %2482 = vmatpush.bf16.msra.mxu0 %v2138
    %2483 = vmatpush.bf16.msra.mxu0 %v2134
    %2484 = vmatpush.bf16.msra.mxu0 %v2130
    %2485 = vmatpush.bf16.msra.mxu0 %v2126
    %2486 = vmatmul.bf16.gmra.mxu0 %v1633
    %v2487 = vpop.f32.mrf.mxu0
    %v2488 = vadd.f32 %v2475, %v2487
    %v2489 = vpop.f32.mrf.mxu0
    %2490 = vdwg.mxu0
    %v2491 = vmul.f32 %v2332, 0.5
    %v2492 = vmul.f32 %v2384, 0.5
    %v2493 = vmul.f32 %v2436, 0.5
    %v2494 = vmul.f32 %v2488, 0.5
    %v2495 = vtanh.pop %v2491
    %v2496 = vtanh.pop %v2492
    %v2497 = vtanh.pop %v2493
    %v2498 = vtanh.pop %v2494
    %v2499 = vmul.f32 %v2495, 0.5
    %v2500 = vmul.f32 %v2496, 0.5
    %v2501 = vmul.f32 %v2497, 0.5
    %v2502 = vmul.f32 %v2498, 0.5
    %v2503 = vadd.f32 %v2499, 0.5
    %v2504 = vadd.f32 %v2500, 0.5
    %v2505 = vadd.f32 %v2501, 0.5
    %v2506 = vadd.f32 %v2502, 0.5
    %v2507 = vpack.c.bf16 %v2503, %v2503
    %v2508 = vpack.c.bf16 %v2504, %v2504
    %v2509 = vpack.c.bf16 %v2505, %v2505
    %v2510 = vpack.c.bf16 %v2506, %v2506
    %v2512 = vperm.slane %v510, 0
    %v2578 = vunpack.c.l.b16 %v446
    %v2579 = vunpack.c.l.b16 %v447
    %v2580 = vunpack.c.l.b16 %v448
    %v2581 = vunpack.c.l.b16 %v449
    %v2582 = vunpack.c.l.b16 %v450
    %v2583 = vunpack.c.l.b16 %v451
    %v2584 = vunpack.c.l.b16 %v452
    %v2585 = vunpack.c.l.b16 %v453
    %v2586 = vunpack.c.l.b16 %v454
    %v2587 = vunpack.c.l.b16 %v455
    %v2588 = vunpack.c.l.b16 %v456
    %v2589 = vunpack.c.l.b16 %v457
    %v2590 = vunpack.c.l.b16 %v458
    %v2591 = vunpack.c.l.b16 %v459
    %v2592 = vunpack.c.l.b16 %v460
    %v2593 = vunpack.c.l.b16 %v461
    %v2594 = vunpack.c.l.b16 %v462
    %v2595 = vunpack.c.l.b16 %v463
    %v2596 = vunpack.c.l.b16 %v464
    %v2597 = vunpack.c.l.b16 %v465
    %v2598 = vunpack.c.l.b16 %v466
    %v2599 = vunpack.c.l.b16 %v467
    %v2600 = vunpack.c.l.b16 %v468
    %v2601 = vunpack.c.l.b16 %v469
    %v2602 = vunpack.c.l.b16 %v470
    %v2603 = vunpack.c.l.b16 %v471
    %v2604 = vunpack.c.l.b16 %v472
    %v2605 = vunpack.c.l.b16 %v473
    %v2606 = vunpack.c.l.b16 %v474
    %v2607 = vunpack.c.l.b16 %v475
    %v2608 = vunpack.c.l.b16 %v476
    %v2609 = vunpack.c.l.b16 %v477
    %v2610 = vunpack.c.l.b16 %v478
    %v2611 = vunpack.c.l.b16 %v479
    %v2612 = vunpack.c.l.b16 %v480
    %v2613 = vunpack.c.l.b16 %v481
    %v2614 = vunpack.c.l.b16 %v482
    %v2615 = vunpack.c.l.b16 %v483
    %v2616 = vunpack.c.l.b16 %v484
    %v2617 = vunpack.c.l.b16 %v485
    %v2618 = vunpack.c.l.b16 %v486
    %v2619 = vunpack.c.l.b16 %v487
    %v2620 = vunpack.c.l.b16 %v488
    %v2621 = vunpack.c.l.b16 %v489
    %v2622 = vunpack.c.l.b16 %v490
    %v2623 = vunpack.c.l.b16 %v491
    %v2624 = vunpack.c.l.b16 %v492
    %v2625 = vunpack.c.l.b16 %v493
    %v2626 = vunpack.c.l.b16 %v494
    %v2627 = vunpack.c.l.b16 %v495
    %v2628 = vunpack.c.l.b16 %v496
    %v2629 = vunpack.c.l.b16 %v497
    %v2630 = vunpack.c.l.b16 %v498
    %v2631 = vunpack.c.l.b16 %v499
    %v2632 = vunpack.c.l.b16 %v500
    %v2633 = vunpack.c.l.b16 %v501
    %v2634 = vunpack.c.l.b16 %v502
    %v2635 = vunpack.c.l.b16 %v503
    %v2636 = vunpack.c.l.b16 %v504
    %v2637 = vunpack.c.l.b16 %v505
    %v2638 = vunpack.c.l.b16 %v506
    %v2639 = vunpack.c.l.b16 %v507
    %v2640 = vunpack.c.l.b16 %v508
    %v2641 = vunpack.c.l.b16 %v509
    %v2642 = vpack.c.b16 %v2579, %v2578
    %v2643 = vpack.c.b16 %v2581, %v2580
    %v2644 = vpack.c.b16 %v2583, %v2582
    %v2645 = vpack.c.b16 %v2585, %v2584
    %v2646 = vpack.c.b16 %v2587, %v2586
    %v2647 = vpack.c.b16 %v2589, %v2588
    %v2648 = vpack.c.b16 %v2591, %v2590
    %v2649 = vpack.c.b16 %v2593, %v2592
    %v2650 = vpack.c.b16 %v2595, %v2594
    %v2651 = vpack.c.b16 %v2597, %v2596
    %v2652 = vpack.c.b16 %v2599, %v2598
    %v2653 = vpack.c.b16 %v2601, %v2600
    %v2654 = vpack.c.b16 %v2603, %v2602
    %v2655 = vpack.c.b16 %v2605, %v2604
    %v2656 = vpack.c.b16 %v2607, %v2606
    %v2657 = vpack.c.b16 %v2609, %v2608
    %v2658 = vpack.c.b16 %v2611, %v2610
    %v2659 = vpack.c.b16 %v2613, %v2612
    %v2660 = vpack.c.b16 %v2615, %v2614
    %v2661 = vpack.c.b16 %v2617, %v2616
    %v2662 = vpack.c.b16 %v2619, %v2618
    %v2663 = vpack.c.b16 %v2621, %v2620
    %v2664 = vpack.c.b16 %v2623, %v2622
    %v2665 = vpack.c.b16 %v2625, %v2624
    %v2666 = vpack.c.b16 %v2627, %v2626
    %v2667 = vpack.c.b16 %v2629, %v2628
    %v2668 = vpack.c.b16 %v2631, %v2630
    %v2669 = vpack.c.b16 %v2633, %v2632
    %v2670 = vpack.c.b16 %v2635, %v2634
    %v2671 = vpack.c.b16 %v2637, %v2636
    %v2672 = vpack.c.b16 %v2639, %v2638
    %v2673 = vpack.c.b16 %v2641, %v2640
    %2706 = vmatpush.bf16.msra.mxu0 %v2649
    %2707 = vmatpush.bf16.msra.mxu0 %v2648
    %2708 = vmatpush.bf16.msra.mxu0 %v2647
    %2709 = vmatpush.bf16.msra.mxu0 %v2646
    %2710 = vmatpush.bf16.msra.mxu0 %v2645
    %2711 = vmatpush.bf16.msra.mxu0 %v2644
    %2712 = vmatpush.bf16.msra.mxu0 %v2643
    %2713 = vmatpush.bf16.msra.mxu0 %v2642
    %2714 = vmatmul.bf16.gmra.mxu0 %v2507
    %v2715 = vpop.f32.mrf.mxu0
    %v2716 = vadd.f32 %v2512, %v2715
    %v2717 = vpop.f32.mrf.mxu0
    %2718 = vdwg.mxu0
    %2719 = vmatpush.bf16.msra.mxu0 %v2657
    %2720 = vmatpush.bf16.msra.mxu0 %v2656
    %2721 = vmatpush.bf16.msra.mxu0 %v2655
    %2722 = vmatpush.bf16.msra.mxu0 %v2654
    %2723 = vmatpush.bf16.msra.mxu0 %v2653
    %2724 = vmatpush.bf16.msra.mxu0 %v2652
    %2725 = vmatpush.bf16.msra.mxu0 %v2651
    %2726 = vmatpush.bf16.msra.mxu0 %v2650
    %2727 = vmatmul.bf16.gmra.mxu0 %v2508
    %v2728 = vpop.f32.mrf.mxu0
    %v2729 = vadd.f32 %v2716, %v2728
    %v2730 = vpop.f32.mrf.mxu0
    %2731 = vdwg.mxu0
    %2732 = vmatpush.bf16.msra.mxu0 %v2665
    %2733 = vmatpush.bf16.msra.mxu0 %v2664
    %2734 = vmatpush.bf16.msra.mxu0 %v2663
    %2735 = vmatpush.bf16.msra.mxu0 %v2662
    %2736 = vmatpush.bf16.msra.mxu0 %v2661
    %2737 = vmatpush.bf16.msra.mxu0 %v2660
    %2738 = vmatpush.bf16.msra.mxu0 %v2659
    %2739 = vmatpush.bf16.msra.mxu0 %v2658
    %2740 = vmatmul.bf16.gmra.mxu0 %v2509
    %v2741 = vpop.f32.mrf.mxu0
    %v2742 = vadd.f32 %v2729, %v2741
    %v2743 = vpop.f32.mrf.mxu0
    %2744 = vdwg.mxu0
    %2745 = vmatpush.bf16.msra.mxu0 %v2673
    %2746 = vmatpush.bf16.msra.mxu0 %v2672
    %2747 = vmatpush.bf16.msra.mxu0 %v2671
    %2748 = vmatpush.bf16.msra.mxu0 %v2670
    %2749 = vmatpush.bf16.msra.mxu0 %v2669
    %2750 = vmatpush.bf16.msra.mxu0 %v2668
    %2751 = vmatpush.bf16.msra.mxu0 %v2667
    %2752 = vmatpush.bf16.msra.mxu0 %v2666
    %2753 = vmatmul.bf16.gmra.mxu0 %v2510
    %v2754 = vpop.f32.mrf.mxu0
    %v2755 = vadd.f32 %v2742, %v2754
    %v2756 = vpop.f32.mrf.mxu0
    %2757 = vdwg.mxu0
    %v2758 = vadd.f32 %v514, %v2755
    %2759 = vst [vmem:[#allocation16] sm:$0xff] %v2758
    // Predicated region
    $region74: #{tpu_custom_call.1} parent=1 // pred_check
      _
    $region75: #{tpu_custom_call.1} parent=1 // pred_check_branch
      %2761 = sbr.rel (0) target = $region77
    $region76: #{tpu_custom_call.1} parent=1 // pred_region
      %2763 = vsyncadd [#allocation4], 0
      %s2765 = sshll.u32 [#allocation16], 4
      %s2766 = int_to_ptr.vmem [resolvable:$true] %s2765
      %s2767 = sshll.u32 %s10, 4
      %s2768 = int_to_ptr.hbm [resolvable:$true] %s2767
      %2770 = dma.vmem_to_hbm [thread:$0]  %s2766, 128, %s2768, [#allocation4]
    $region77: #{tpu_custom_call.1} parent=1 // pred_fallthru
      _
    // Predicated region
    $region78: #{tpu_custom_call.1} parent=1 // pred_check
      _
    $region79: #{tpu_custom_call.1} parent=1 // pred_check_branch
      %2772 = sbr.rel (0) target = $region81
    $region80: #{tpu_custom_call.1} parent=1 // pred_region
      %2774 = dma.done [#allocation4], 128
    $region81: #{tpu_custom_call.1} parent=1 // pred_fallthru
      _
    %2775 = vsyncpa [#allocation3], 1
    %2776 = vsyncpa [#allocation6], 1
    %2777 = vsyncpa [#allocation9], 1
    %2778 = vsyncpa [#allocation12], 1
    %2779 = vsyncpa [#allocation15], 1
    %2780 = vsyncpa [#allocation4], 1

</llo_original>
